<compile_context>
chip_gen: v7x
topology: tpu7x:2x2x1
jax: 0.10.0
libtpu: 0.0.40
codegen_flags: <defaults>
</compile_context>

<pallas_src>
import functools

import jax
import jax.numpy as jnp
from jax.experimental import pallas as pl
from jax.experimental.pallas import tpu as pltpu


# ----------------------------- Pallas kernel ------------------------------- #

def _graph_attention_kernel(xq_ref, xk_ref, xv_ref, wqkv_ref, bqkv_ref,
                            wout_ref, bout_ref, adj_ref, o_ref,
                            q_scr, m_scr, l_scr, acc_scr,
                            *, num_heads, head_dim):
    """Grid = (batch, q-tile, k-tile); k-tile is the online-softmax axis.

    xq: (1, TQ, E) bf16      xk/xv: (1, TK, E) bf16
    wqkv: (3, E, E) bf16     bqkv: (3, 1, E) f32
    wout: (E, E) bf16        bout: (1, E) f32       adj: (TQ, TK) f32
    o: (1, TQ, E) f32
    scratch: q_scr (H, TQ, D) bf16; m/l (H, TQ, 1) f32; acc (H, TQ, D) f32
    """
    H, D = num_heads, head_dim
    tq = xq_ref.shape[1]
    tk = xk_ref.shape[1]
    ki = pl.program_id(2)
    nk = pl.num_programs(2)

    @pl.when(ki == 0)
    def _init():
        # Project the q tile once per (batch, q-tile). 1/sqrt(D) is already
        # folded into W_q / b_q host-side.
        q = jnp.dot(xq_ref[0], wqkv_ref[0],
                    preferred_element_type=jnp.float32) + bqkv_ref[0]   # (TQ, E)
        q_hd = q.reshape(tq, H, D).transpose(1, 0, 2)                   # (H, TQ, D)
        q_scr[...] = q_hd.astype(jnp.bfloat16)
        m_scr[...] = jnp.full(m_scr.shape, -jnp.inf, m_scr.dtype)
        l_scr[...] = jnp.zeros(l_scr.shape, l_scr.dtype)
        acc_scr[...] = jnp.zeros(acc_scr.shape, acc_scr.dtype)

    # Project the current K/V tile (bf16 operands, f32 accumulation).
    k = jnp.dot(xk_ref[0], wqkv_ref[1],
                preferred_element_type=jnp.float32) + bqkv_ref[1]       # (TK, E)
    v = jnp.dot(xv_ref[0], wqkv_ref[2],
                preferred_element_type=jnp.float32) + bqkv_ref[2]
    k_hd = k.reshape(tk, H, D).transpose(1, 0, 2).astype(jnp.bfloat16)  # (H, TK, D)
    v_hd = v.reshape(tk, H, D).transpose(1, 0, 2).astype(jnp.bfloat16)

    # Head-batched QK^T: no per-head narrow lane slices, no explicit k.T.
    s = jnp.einsum('hqd,hkd->hqk', q_scr[...], k_hd,
                   preferred_element_type=jnp.float32)                  # (H, TQ, TK)
    s = s + adj_ref[...]                                                # bcast heads

    # Online (flash) softmax update, f32 throughout.
    m_prev = m_scr[...]
    m_new = jnp.maximum(m_prev, jnp.max(s, axis=-1, keepdims=True))
    alpha = jnp.exp(m_prev - m_new)
    p = jnp.exp(s - m_new)
    l_scr[...] = alpha * l_scr[...] + jnp.sum(p, axis=-1, keepdims=True)
    acc_scr[...] = alpha * acc_scr[...] + jnp.einsum(
        'hqk,hkd->hqd', p.astype(jnp.bfloat16), v_hd,
        preferred_element_type=jnp.float32)
    m_scr[...] = m_new

    @pl.when(ki == nk - 1)
    def _finalize():
        ctx = acc_scr[...] * pl.reciprocal(l_scr[...], approx=True)     # (H, TQ, D)
        # Concatenate heads -> one full-E-contraction out projection and a
        # single lane-dense (TQ, E) store.
        ctx2d = ctx.transpose(1, 0, 2).reshape(tq, H * D)               # (TQ, E)
        out = jnp.dot(ctx2d.astype(jnp.bfloat16), wout_ref[...],
                      preferred_element_type=jnp.float32) + bout_ref[...]
        o_ref[0] = out.astype(o_ref.dtype)


# ------------------------------ host wrapper ------------------------------- #

def graph_attention_forward(params, query, key, value, adj, num_heads):
    """query/key/value: (B, S, E) f32, adj: (S, S) f32 -> (B, S, E) f32."""
    B, S, E = query.shape
    H = num_heads
    D = E // H
    scale = 1.0 / (D ** 0.5)

    # Tile sizes: full S at toy shapes, 128/512 when S divides evenly.
    TILE_Q = 128 if S % 128 == 0 else S
    TILE_K = 512 if S % 512 == 0 else (128 if S % 128 == 0 else S)
    NQ, NK = S // TILE_Q, S // TILE_K

    # Weights: fold 1/sqrt(D) into W_q/b_q, stack QKV, cast matmul operands
    # to bf16 once host-side (halves weight/activation DMA). Biases stay f32.
    wq, bq = params["q"]
    wk, bk = params["k"]
    wv, bv = params["v"]
    w_out, b_out = params["out"]
    w_qkv = jnp.stack([wq * scale, wk, wv]).astype(jnp.bfloat16)      # (3, E, E)
    b_qkv = jnp.stack([bq * scale, bk, bv])[:, None, :]               # (3, 1, E) f32
    w_out_bf = w_out.astype(jnp.bfloat16)                             # (E, E)
    b_out2 = b_out.reshape(1, E)                                      # (1, E) f32

    q_bf = query.astype(jnp.bfloat16)
    k_bf = key.astype(jnp.bfloat16)
    v_bf = value.astype(jnp.bfloat16)

    kernel = functools.partial(_graph_attention_kernel,
                               num_heads=H, head_dim=D)

    flops = B * (4 * S * E * E            # q proj + out proj
                 + NQ * 4 * S * E * E     # k/v proj (recomputed per q tile)
                 + 4 * S * S * E)         # QK^T + PV
    transcendentals = B * H * S * (S + NK)
    bytes_accessed = (2 * B * S * E * (1 + 2 * NQ)   # bf16 activations
                      + 8 * E * E                    # bf16 weights
                      + 4 * B * S * S                # f32 adj (per batch)
                      + 4 * B * S * E)               # f32 output

    return pl.pallas_call(
        kernel,
        out_shape=jax.ShapeDtypeStruct((B, S, E), jnp.float32),
        grid=(B, NQ, NK),
        in_specs=[
            pl.BlockSpec((1, TILE_Q, E), lambda b, qi, ki: (b, qi, 0)),   # xq
            pl.BlockSpec((1, TILE_K, E), lambda b, qi, ki: (b, ki, 0)),   # xk
            pl.BlockSpec((1, TILE_K, E), lambda b, qi, ki: (b, ki, 0)),   # xv
            pl.BlockSpec((3, E, E), lambda b, qi, ki: (0, 0, 0)),         # w_qkv
            pl.BlockSpec((3, 1, E), lambda b, qi, ki: (0, 0, 0)),         # b_qkv
            pl.BlockSpec((E, E), lambda b, qi, ki: (0, 0)),               # w_out
            pl.BlockSpec((1, E), lambda b, qi, ki: (0, 0)),               # b_out
            pl.BlockSpec((TILE_Q, TILE_K), lambda b, qi, ki: (qi, ki)),   # adj
        ],
        out_specs=pl.BlockSpec((1, TILE_Q, E), lambda b, qi, ki: (b, qi, 0)),
        scratch_shapes=[
            pltpu.VMEM((H, TILE_Q, D), jnp.bfloat16),   # projected q tile
            pltpu.VMEM((H, TILE_Q, 1), jnp.float32),    # running max m
            pltpu.VMEM((H, TILE_Q, 1), jnp.float32),    # running sum l
            pltpu.VMEM((H, TILE_Q, D), jnp.float32),    # running acc
        ],
        compiler_params=pltpu.CompilerParams(
            dimension_semantics=("parallel", "parallel", "arbitrary"),
            vmem_limit_bytes=32 * 1024 * 1024,
        ),
        cost_estimate=pl.CostEstimate(
            flops=flops,
            transcendentals=transcendentals,
            bytes_accessed=bytes_accessed,
        ),
    )(q_bf, k_bf, v_bf, w_qkv, b_qkv, w_out_bf, b_out2, adj)


def init_graph_attention_params(key, embed_size):
    """Deterministic params mirroring nn.Linear(embed_size, embed_size) x4."""
    keys = jax.random.split(key, 8)
    bound = 1.0 / (embed_size ** 0.5)

    def linear(kw, kb):
        # PyTorch nn.Linear weight is (out, in); store transposed (in, out).
        w = jax.random.uniform(kw, (embed_size, embed_size), jnp.float32,
                               -bound, bound)
        b = jax.random.uniform(kb, (embed_size,), jnp.float32, -bound, bound)
        return w.T, b

    return {
        "q": linear(keys[0], keys[1]),
        "k": linear(keys[2], keys[3]),
        "v": linear(keys[4], keys[5]),
        "out": linear(keys[6], keys[7]),
    }


# ------------------------------ references --------------------------------- #

def reference_forward_f32(params, query, key, value, adj, num_heads):
    """Pure-f32 mirror of the PyTorch module (softmax over full rows)."""
    B, S, E = query.shape
    D = E // num_heads

    def lin(x, p):
        return x @ p[0] + p[1]

    Q = lin(query, params["q"]).reshape(B, S, num_heads, D).transpose(0, 2, 1, 3)
    K = lin(key, params["k"]).reshape(B, S, num_heads, D).transpose(0, 2, 1, 3)
    V = lin(value, params["v"]).reshape(B, S, num_heads, D).transpose(0, 2, 1, 3)
    scores = jnp.einsum("bhqd,bhkd->bhqk", Q, K) / (D ** 0.5)
    scores = scores + adj[None, None]
    w = jax.nn.softmax(scores, axis=-1)
    attn = jnp.einsum("bhqk,bhkd->bhqd", w, V)
    attn = attn.transpose(0, 2, 1, 3).reshape(B, S, E)
    return lin(attn, params["out"])


def reference_forward_bf16(params, query, key, value, adj, num_heads):
    """Same math with the kernel's bf16 operand casts (f32 accumulation)."""
    B, S, E = query.shape
    D = E // num_heads
    scale = 1.0 / (D ** 0.5)
    bf16, f32 = jnp.bfloat16, jnp.float32

    def lin(x, w, b):
        return jnp.dot(x.astype(bf16), w.astype(bf16),
                       preferred_element_type=f32) + b

    Q = lin(query, params["q"][0] * scale, params["q"][1] * scale)
    K = lin(key, params["k"][0], params["k"][1])
    V = lin(value, params["v"][0], params["v"][1])
    Q = Q.reshape(B, S, num_heads, D).transpose(0, 2, 1, 3)
    K = K.reshape(B, S, num_heads, D).transpose(0, 2, 1, 3)
    V = V.reshape(B, S, num_heads, D).transpose(0, 2, 1, 3)
    s = jnp.einsum("bhqd,bhkd->bhqk", Q.astype(bf16), K.astype(bf16),
                   preferred_element_type=f32) + adj[None, None]
    w = jax.nn.softmax(s, axis=-1)
    ctx = jnp.einsum("bhqk,bhkd->bhqd", w.astype(bf16), V.astype(bf16),
                     preferred_element_type=f32)
    ctx = ctx.transpose(0, 2, 1, 3).reshape(B, S, E)
    return jnp.dot(ctx.astype(bf16), params["out"][0].astype(bf16),
                   preferred_element_type=f32) + params["out"][1]


if __name__ == "__main__":
    embed_size = 32
    num_heads = 4
    batch, seq = 2, 8

    root = jax.random.PRNGKey(0)
    k_params, k_q, k_k, k_v, k_adj = jax.random.split(root, 5)

    params = init_graph_attention_params(k_params, embed_size)
    query = jax.random.normal(k_q, (batch, seq, embed_size), jnp.float32)
    key = jax.random.normal(k_k, (batch, seq, embed_size), jnp.float32)
    value = jax.random.normal(k_v, (batch, seq, embed_size), jnp.float32)
    adj = jax.random.normal(k_adj, (seq, seq), jnp.float32)

    out = graph_attention_forward(params, query, key, value, adj, num_heads)
    out = jax.block_until_ready(out)
    assert out.shape == (batch, seq, embed_size)
    assert bool(jnp.all(jnp.isfinite(out))), "non-finite output"

    # Tight check against a bf16-matched reference (same operand casts).
    ref_bf16 = reference_forward_bf16(params, query, key, value, adj, num_heads)
    assert jnp.allclose(out, ref_bf16, atol=1e-2, rtol=1e-2), \
        "mismatch vs bf16-matched reference"

    # Loose check against the pure-f32 reference (bf16-level tolerance).
    ref_f32 = reference_forward_f32(params, query, key, value, adj, num_heads)
    assert jnp.allclose(out, ref_f32, atol=5e-2, rtol=5e-2), \
        "mismatch vs f32 reference"

    print("KERNEL_OK")
</pallas_src>

<mosaic_0001>
module attributes {stable_mosaic.version = 11 : i64} {
  func.func @_graph_attention_kernel(%arg0: i32, %arg1: i32, %arg2: i32, %arg3: memref<1x8x32xbf16, #tpu.memory_space<vmem>>, %arg4: memref<1x8x32xbf16, #tpu.memory_space<vmem>>, %arg5: memref<1x8x32xbf16, #tpu.memory_space<vmem>>, %arg6: memref<3x32x32xbf16, #tpu.memory_space<vmem>>, %arg7: memref<3x1x32xf32, #tpu.memory_space<vmem>>, %arg8: memref<32x32xbf16, #tpu.memory_space<vmem>>, %arg9: memref<1x32xf32, #tpu.memory_space<vmem>>, %arg10: memref<8x8xf32, #tpu.memory_space<vmem>>, %arg11: memref<1x8x32xf32, #tpu.memory_space<vmem>>, %arg12: memref<4x8x8xbf16, #tpu.memory_space<vmem>>, %arg13: memref<4x8x1xf32, #tpu.memory_space<vmem>>, %arg14: memref<4x8x1xf32, #tpu.memory_space<vmem>>, %arg15: memref<4x8x8xf32, #tpu.memory_space<vmem>>) attributes {dimension_semantics = [#tpu.dimension_semantics<parallel>, #tpu.dimension_semantics<parallel>, #tpu.dimension_semantics<arbitrary>], iteration_bounds = array<i64: 2, 1, 1>, scalar_prefetch = 0 : i64, scratch_operands = 4 : i64, tpu.core_type = #tpu.core_type<tc>, window_params = [{transform_indices = @transform_0, window_bounds = array<i64: 1, 8, 32>}, {transform_indices = @transform_1, window_bounds = array<i64: 1, 8, 32>}, {transform_indices = @transform_2, window_bounds = array<i64: 1, 8, 32>}, {pipeline_mode = #tpu.pipeline_mode<synchronous>, transform_indices = @transform_3, window_bounds = array<i64: 3, 32, 32>}, {pipeline_mode = #tpu.pipeline_mode<synchronous>, transform_indices = @transform_4, window_bounds = array<i64: 3, 1, 32>}, {pipeline_mode = #tpu.pipeline_mode<synchronous>, transform_indices = @transform_5, window_bounds = array<i64: 32, 32>}, {pipeline_mode = #tpu.pipeline_mode<synchronous>, transform_indices = @transform_6, window_bounds = array<i64: 1, 32>}, {transform_indices = @transform_7, window_bounds = array<i64: 8, 8>}, {transform_indices = @transform_8, window_bounds = array<i64: 1, 8, 32>}]} {
    %c0_i32 = arith.constant 0 : i32
    %0 = arith.cmpi eq, %arg2, %c0_i32 : i32
    %1 = arith.extui %0 : i1 to i32
    %c0_i32_0 = arith.constant 0 : i32
    %2 = arith.cmpi ne, %1, %c0_i32_0 : i32
    scf.if %2 {
      %c0_46 = arith.constant 0 : index
      %c0_47 = arith.constant 0 : index
      %c0_48 = arith.constant 0 : index
      %59 = vector.load %arg3[%c0_46, %c0_47, %c0_48] : memref<1x8x32xbf16, #tpu.memory_space<vmem>>, vector<1x8x32xbf16>
      %60 = vector.shape_cast %59 : vector<1x8x32xbf16> to vector<8x32xbf16>
      %c0_49 = arith.constant 0 : index
      %c0_50 = arith.constant 0 : index
      %c0_51 = arith.constant 0 : index
      %61 = vector.load %arg6[%c0_49, %c0_50, %c0_51] : memref<3x32x32xbf16, #tpu.memory_space<vmem>>, vector<1x32x32xbf16>
      %62 = vector.shape_cast %61 : vector<1x32x32xbf16> to vector<32x32xbf16>
      %cst_52 = arith.constant dense<0.000000e+00> : vector<8x32xf32>
      %63 = tpu.matmul %60, %62, %cst_52 {dimension_numbers = #tpu.dot_dimension_numbers<[1], [0], [0], [1], [0, 0, 1, 1], [], []>} : vector<8x32xbf16>, vector<32x32xbf16>, vector<8x32xf32> -> vector<8x32xf32>
      %c0_53 = arith.constant 0 : index
      %c0_54 = arith.constant 0 : index
      %c0_55 = arith.constant 0 : index
      %64 = vector.load %arg7[%c0_53, %c0_54, %c0_55] : memref<3x1x32xf32, #tpu.memory_space<vmem>>, vector<1x1x32xf32>
      %65 = vector.shape_cast %64 : vector<1x1x32xf32> to vector<1x32xf32>
      %66 = vector.broadcast %65 : vector<1x32xf32> to vector<8x32xf32>
      %67 = arith.addf %63, %66 : vector<8x32xf32>
      %68 = vector.shape_cast %67 : vector<8x32xf32> to vector<8x4x8xf32>
      %69 = tpu.transpose %68, [1, 0, 2] : vector<8x4x8xf32> -> vector<4x8x8xf32>
      %70 = arith.truncf %69 : vector<4x8x8xf32> to vector<4x8x8xbf16>
      %c0_56 = arith.constant 0 : index
      %c0_57 = arith.constant 0 : index
      %c0_58 = arith.constant 0 : index
      %71 = vector.load %arg12[%c0_56, %c0_57, %c0_58] : memref<4x8x8xbf16, #tpu.memory_space<vmem>>, vector<4x8x8xbf16>
      tpu.vector_store %arg12[%c0_56, %c0_57, %c0_58], %70 {strides = array<i32>} : memref<4x8x8xbf16, #tpu.memory_space<vmem>>, vector<4x8x8xbf16>,
      %cst_59 = arith.constant 0xFF800000 : f32
      %72 = vector.broadcast %cst_59 : f32 to vector<4x8x1xf32>
      %c0_60 = arith.constant 0 : index
      %c0_61 = arith.constant 0 : index
      %c0_62 = arith.constant 0 : index
      %73 = vector.load %arg13[%c0_60, %c0_61, %c0_62] : memref<4x8x1xf32, #tpu.memory_space<vmem>>, vector<4x8x1xf32>
      tpu.vector_store %arg13[%c0_60, %c0_61, %c0_62], %72 {strides = array<i32>} : memref<4x8x1xf32, #tpu.memory_space<vmem>>, vector<4x8x1xf32>,
      %cst_63 = arith.constant 0.000000e+00 : f32
      %74 = vector.broadcast %cst_63 : f32 to vector<4x8x1xf32>
      %c0_64 = arith.constant 0 : index
      %c0_65 = arith.constant 0 : index
      %c0_66 = arith.constant 0 : index
      %75 = vector.load %arg14[%c0_64, %c0_65, %c0_66] : memref<4x8x1xf32, #tpu.memory_space<vmem>>, vector<4x8x1xf32>
      tpu.vector_store %arg14[%c0_64, %c0_65, %c0_66], %74 {strides = array<i32>} : memref<4x8x1xf32, #tpu.memory_space<vmem>>, vector<4x8x1xf32>,
      %cst_67 = arith.constant 0.000000e+00 : f32
      %76 = vector.broadcast %cst_67 : f32 to vector<4x8x8xf32>
      %c0_68 = arith.constant 0 : index
      %c0_69 = arith.constant 0 : index
      %c0_70 = arith.constant 0 : index
      %77 = vector.load %arg15[%c0_68, %c0_69, %c0_70] : memref<4x8x8xf32, #tpu.memory_space<vmem>>, vector<4x8x8xf32>
      tpu.vector_store %arg15[%c0_68, %c0_69, %c0_70], %76 {strides = array<i32>} : memref<4x8x8xf32, #tpu.memory_space<vmem>>, vector<4x8x8xf32>,
    } else {
    }
    %c0 = arith.constant 0 : index
    %c0_1 = arith.constant 0 : index
    %c0_2 = arith.constant 0 : index
    %3 = vector.load %arg4[%c0, %c0_1, %c0_2] : memref<1x8x32xbf16, #tpu.memory_space<vmem>>, vector<1x8x32xbf16>
    %4 = vector.shape_cast %3 : vector<1x8x32xbf16> to vector<8x32xbf16>
    %c1 = arith.constant 1 : index
    %c0_3 = arith.constant 0 : index
    %c0_4 = arith.constant 0 : index
    %5 = vector.load %arg6[%c1, %c0_3, %c0_4] : memref<3x32x32xbf16, #tpu.memory_space<vmem>>, vector<1x32x32xbf16>
    %6 = vector.shape_cast %5 : vector<1x32x32xbf16> to vector<32x32xbf16>
    %cst = arith.constant dense<0.000000e+00> : vector<8x32xf32>
    %7 = tpu.matmul %4, %6, %cst {dimension_numbers = #tpu.dot_dimension_numbers<[1], [0], [0], [1], [0, 0, 1, 1], [], []>} : vector<8x32xbf16>, vector<32x32xbf16>, vector<8x32xf32> -> vector<8x32xf32>
    %c1_5 = arith.constant 1 : index
    %c0_6 = arith.constant 0 : index
    %c0_7 = arith.constant 0 : index
    %8 = vector.load %arg7[%c1_5, %c0_6, %c0_7] : memref<3x1x32xf32, #tpu.memory_space<vmem>>, vector<1x1x32xf32>
    %9 = vector.shape_cast %8 : vector<1x1x32xf32> to vector<1x32xf32>
    %10 = vector.broadcast %9 : vector<1x32xf32> to vector<8x32xf32>
    %11 = arith.addf %7, %10 : vector<8x32xf32>
    %c0_8 = arith.constant 0 : index
    %c0_9 = arith.constant 0 : index
    %c0_10 = arith.constant 0 : index
    %12 = vector.load %arg5[%c0_8, %c0_9, %c0_10] : memref<1x8x32xbf16, #tpu.memory_space<vmem>>, vector<1x8x32xbf16>
    %13 = vector.shape_cast %12 : vector<1x8x32xbf16> to vector<8x32xbf16>
    %c2 = arith.constant 2 : index
    %c0_11 = arith.constant 0 : index
    %c0_12 = arith.constant 0 : index
    %14 = vector.load %arg6[%c2, %c0_11, %c0_12] : memref<3x32x32xbf16, #tpu.memory_space<vmem>>, vector<1x32x32xbf16>
    %15 = vector.shape_cast %14 : vector<1x32x32xbf16> to vector<32x32xbf16>
    %cst_13 = arith.constant dense<0.000000e+00> : vector<8x32xf32>
    %16 = tpu.matmul %13, %15, %cst_13 {dimension_numbers = #tpu.dot_dimension_numbers<[1], [0], [0], [1], [0, 0, 1, 1], [], []>} : vector<8x32xbf16>, vector<32x32xbf16>, vector<8x32xf32> -> vector<8x32xf32>
    %c2_14 = arith.constant 2 : index
    %c0_15 = arith.constant 0 : index
    %c0_16 = arith.constant 0 : index
    %17 = vector.load %arg7[%c2_14, %c0_15, %c0_16] : memref<3x1x32xf32, #tpu.memory_space<vmem>>, vector<1x1x32xf32>
    %18 = vector.shape_cast %17 : vector<1x1x32xf32> to vector<1x32xf32>
    %19 = vector.broadcast %18 : vector<1x32xf32> to vector<8x32xf32>
    %20 = arith.addf %16, %19 : vector<8x32xf32>
    %21 = vector.shape_cast %11 : vector<8x32xf32> to vector<8x4x8xf32>
    %22 = tpu.transpose %21, [1, 0, 2] : vector<8x4x8xf32> -> vector<4x8x8xf32>
    %23 = arith.truncf %22 : vector<4x8x8xf32> to vector<4x8x8xbf16>
    %24 = vector.shape_cast %20 : vector<8x32xf32> to vector<8x4x8xf32>
    %25 = tpu.transpose %24, [1, 0, 2] : vector<8x4x8xf32> -> vector<4x8x8xf32>
    %26 = arith.truncf %25 : vector<4x8x8xf32> to vector<4x8x8xbf16>
    %c0_17 = arith.constant 0 : index
    %c0_18 = arith.constant 0 : index
    %c0_19 = arith.constant 0 : index
    %27 = vector.load %arg12[%c0_17, %c0_18, %c0_19] : memref<4x8x8xbf16, #tpu.memory_space<vmem>>, vector<4x8x8xbf16>
    "tpu.trace_start"() <{level = 10 : i32, message = "hqd,hkd->hqk"}> : () -> ()
    %cst_20 = arith.constant dense<0.000000e+00> : vector<4x8x8xf32>
    %28 = tpu.matmul %27, %23, %cst_20 {dimension_numbers = #tpu.dot_dimension_numbers<[2], [2], [1], [1], [0, 0, 0, 1, 1, 1], [0], [0]>} : vector<4x8x8xbf16>, vector<4x8x8xbf16>, vector<4x8x8xf32> -> vector<4x8x8xf32>
    "tpu.trace_stop"() : () -> ()
    %c0_21 = arith.constant 0 : index
    %c0_22 = arith.constant 0 : index
    %29 = vector.load %arg10[%c0_21, %c0_22] : memref<8x8xf32, #tpu.memory_space<vmem>>, vector<8x8xf32>
    %30 = vector.shape_cast %29 : vector<8x8xf32> to vector<1x8x8xf32>
    %31 = vector.broadcast %30 : vector<1x8x8xf32> to vector<4x8x8xf32>
    %32 = arith.addf %28, %31 : vector<4x8x8xf32>
    %c0_23 = arith.constant 0 : index
    %c0_24 = arith.constant 0 : index
    %c0_25 = arith.constant 0 : index
    %33 = vector.load %arg13[%c0_23, %c0_24, %c0_25] : memref<4x8x1xf32, #tpu.memory_space<vmem>>, vector<4x8x1xf32>
    %cst_26 = arith.constant dense<0xFF800000> : vector<4x8xf32>
    %34 = vector.multi_reduction <maximumf>, %32, %cst_26 [2] : vector<4x8x8xf32> to vector<4x8xf32>
    %35 = vector.shape_cast %34 : vector<4x8xf32> to vector<4x8x1xf32>
    %36 = arith.maximumf %33, %35 : vector<4x8x1xf32>
    %37 = arith.subf %33, %36 : vector<4x8x1xf32>
    %38 = math.exp %37 : vector<4x8x1xf32>
    %39 = vector.broadcast %36 : vector<4x8x1xf32> to vector<4x8x8xf32>
    %40 = arith.subf %32, %39 : vector<4x8x8xf32>
    %41 = math.exp %40 : vector<4x8x8xf32>
    %c0_27 = arith.constant 0 : index
    %c0_28 = arith.constant 0 : index
    %c0_29 = arith.constant 0 : index
    %42 = vector.load %arg14[%c0_27, %c0_28, %c0_29] : memref<4x8x1xf32, #tpu.memory_space<vmem>>, vector<4x8x1xf32>
    %43 = arith.mulf %38, %42 : vector<4x8x1xf32>
    %cst_30 = arith.constant dense<0.000000e+00> : vector<4x8xf32>
    %44 = vector.multi_reduction <add>, %41, %cst_30 [2] : vector<4x8x8xf32> to vector<4x8xf32>
    %45 = vector.shape_cast %44 : vector<4x8xf32> to vector<4x8x1xf32>
    %46 = arith.addf %43, %45 : vector<4x8x1xf32>
    %c0_31 = arith.constant 0 : index
    %c0_32 = arith.constant 0 : index
    %c0_33 = arith.constant 0 : index
    %47 = vector.load %arg14[%c0_31, %c0_32, %c0_33] : memref<4x8x1xf32, #tpu.memory_space<vmem>>, vector<4x8x1xf32>
    tpu.vector_store %arg14[%c0_31, %c0_32, %c0_33], %46 {strides = array<i32>} : memref<4x8x1xf32, #tpu.memory_space<vmem>>, vector<4x8x1xf32>,
    %c0_34 = arith.constant 0 : index
    %c0_35 = arith.constant 0 : index
    %c0_36 = arith.constant 0 : index
    %48 = vector.load %arg15[%c0_34, %c0_35, %c0_36] : memref<4x8x8xf32, #tpu.memory_space<vmem>>, vector<4x8x8xf32>
    %49 = vector.broadcast %38 : vector<4x8x1xf32> to vector<4x8x8xf32>
    %50 = arith.mulf %49, %48 : vector<4x8x8xf32>
    %51 = arith.truncf %41 : vector<4x8x8xf32> to vector<4x8x8xbf16>
    "tpu.trace_start"() <{level = 10 : i32, message = "hqk,hkd->hqd"}> : () -> ()
    %cst_37 = arith.constant dense<0.000000e+00> : vector<4x8x8xf32>
    %52 = tpu.matmul %51, %26, %cst_37 {dimension_numbers = #tpu.dot_dimension_numbers<[2], [1], [1], [2], [0, 0, 0, 1, 1, 2], [0], [0]>} : vector<4x8x8xbf16>, vector<4x8x8xbf16>, vector<4x8x8xf32> -> vector<4x8x8xf32>
    "tpu.trace_stop"() : () -> ()
    %53 = arith.addf %50, %52 : vector<4x8x8xf32>
    %c0_38 = arith.constant 0 : index
    %c0_39 = arith.constant 0 : index
    %c0_40 = arith.constant 0 : index
    %54 = vector.load %arg15[%c0_38, %c0_39, %c0_40] : memref<4x8x8xf32, #tpu.memory_space<vmem>>, vector<4x8x8xf32>
    tpu.vector_store %arg15[%c0_38, %c0_39, %c0_40], %53 {strides = array<i32>} : memref<4x8x8xf32, #tpu.memory_space<vmem>>, vector<4x8x8xf32>,
    %c0_41 = arith.constant 0 : index
    %c0_42 = arith.constant 0 : index
    %c0_43 = arith.constant 0 : index
    %55 = vector.load %arg13[%c0_41, %c0_42, %c0_43] : memref<4x8x1xf32, #tpu.memory_space<vmem>>, vector<4x8x1xf32>
    tpu.vector_store %arg13[%c0_41, %c0_42, %c0_43], %36 {strides = array<i32>} : memref<4x8x1xf32, #tpu.memory_space<vmem>>, vector<4x8x1xf32>,
    %c0_i32_44 = arith.constant 0 : i32
    %56 = arith.cmpi eq, %arg2, %c0_i32_44 : i32
    %57 = arith.extui %56 : i1 to i32
    %c0_i32_45 = arith.constant 0 : i32
    %58 = arith.cmpi ne, %57, %c0_i32_45 : i32
    scf.if %58 {
      %c0_46 = arith.constant 0 : index
      %c0_47 = arith.constant 0 : index
      %c0_48 = arith.constant 0 : index
      %59 = vector.load %arg15[%c0_46, %c0_47, %c0_48] : memref<4x8x8xf32, #tpu.memory_space<vmem>>, vector<4x8x8xf32>
      %c0_49 = arith.constant 0 : index
      %c0_50 = arith.constant 0 : index
      %c0_51 = arith.constant 0 : index
      %60 = vector.load %arg14[%c0_49, %c0_50, %c0_51] : memref<4x8x1xf32, #tpu.memory_space<vmem>>, vector<4x8x1xf32>
      %61 = tpu.reciprocal %60 {approx = true} : vector<4x8x1xf32> -> vector<4x8x1xf32>
      %62 = vector.broadcast %61 : vector<4x8x1xf32> to vector<4x8x8xf32>
      %63 = arith.mulf %59, %62 : vector<4x8x8xf32>
      %64 = tpu.transpose %63, [1, 0, 2] : vector<4x8x8xf32> -> vector<8x4x8xf32>
      %65 = vector.shape_cast %64 : vector<8x4x8xf32> to vector<8x32xf32>
      %66 = arith.truncf %65 : vector<8x32xf32> to vector<8x32xbf16>
      %c0_52 = arith.constant 0 : index
      %c0_53 = arith.constant 0 : index
      %67 = vector.load %arg8[%c0_52, %c0_53] : memref<32x32xbf16, #tpu.memory_space<vmem>>, vector<32x32xbf16>
      %cst_54 = arith.constant dense<0.000000e+00> : vector<8x32xf32>
      %68 = tpu.matmul %66, %67, %cst_54 {dimension_numbers = #tpu.dot_dimension_numbers<[1], [0], [0], [1], [0, 0, 1, 1], [], []>} : vector<8x32xbf16>, vector<32x32xbf16>, vector<8x32xf32> -> vector<8x32xf32>
      %c0_55 = arith.constant 0 : index
      %c0_56 = arith.constant 0 : index
      %69 = vector.load %arg9[%c0_55, %c0_56] : memref<1x32xf32, #tpu.memory_space<vmem>>, vector<1x32xf32>
      %70 = vector.broadcast %69 : vector<1x32xf32> to vector<8x32xf32>
      %71 = arith.addf %68, %70 : vector<8x32xf32>
      %c0_57 = arith.constant 0 : index
      %c0_58 = arith.constant 0 : index
      %c0_59 = arith.constant 0 : index
      %72 = vector.load %arg11[%c0_57, %c0_58, %c0_59] : memref<1x8x32xf32, #tpu.memory_space<vmem>>, vector<1x8x32xf32>
      %73 = vector.shape_cast %72 : vector<1x8x32xf32> to vector<8x32xf32>
      %74 = vector.shape_cast %71 : vector<8x32xf32> to vector<1x8x32xf32>
      tpu.vector_store %arg11[%c0_57, %c0_58, %c0_59], %74 {strides = array<i32>} : memref<1x8x32xf32, #tpu.memory_space<vmem>>, vector<1x8x32xf32>,
    } else {
    }
    return
  }
  func.func @transform_0(%arg0: i32, %arg1: i32, %arg2: i32) -> (i32, i32, i32) {
    %c0_i32 = arith.constant 0 : i32
    %c0_i32_0 = arith.constant 0 : i32
    return %arg0, %arg1, %c0_i32 : i32, i32, i32
  }
  func.func @transform_1(%arg0: i32, %arg1: i32, %arg2: i32) -> (i32, i32, i32) {
    %c0_i32 = arith.constant 0 : i32
    %c0_i32_0 = arith.constant 0 : i32
    return %arg0, %arg2, %c0_i32 : i32, i32, i32
  }
  func.func @transform_2(%arg0: i32, %arg1: i32, %arg2: i32) -> (i32, i32, i32) {
    %c0_i32 = arith.constant 0 : i32
    %c0_i32_0 = arith.constant 0 : i32
    return %arg0, %arg2, %c0_i32 : i32, i32, i32
  }
  func.func @transform_3(%arg0: i32, %arg1: i32, %arg2: i32) -> (i32, i32, i32) {
    %c0_i32 = arith.constant 0 : i32
    %c0_i32_0 = arith.constant 0 : i32
    %c0_i32_1 = arith.constant 0 : i32
    %c0_i32_2 = arith.constant 0 : i32
    return %c0_i32, %c0_i32_0, %c0_i32_1 : i32, i32, i32
  }
  func.func @transform_4(%arg0: i32, %arg1: i32, %arg2: i32) -> (i32, i32, i32) {
    %c0_i32 = arith.constant 0 : i32
    %c0_i32_0 = arith.constant 0 : i32
    %c0_i32_1 = arith.constant 0 : i32
    %c0_i32_2 = arith.constant 0 : i32
    return %c0_i32, %c0_i32_0, %c0_i32_1 : i32, i32, i32
  }
  func.func @transform_5(%arg0: i32, %arg1: i32, %arg2: i32) -> (i32, i32) {
    %c0_i32 = arith.constant 0 : i32
    %c0_i32_0 = arith.constant 0 : i32
    %c0_i32_1 = arith.constant 0 : i32
    return %c0_i32, %c0_i32_0 : i32, i32
  }
  func.func @transform_6(%arg0: i32, %arg1: i32, %arg2: i32) -> (i32, i32) {
    %c0_i32 = arith.constant 0 : i32
    %c0_i32_0 = arith.constant 0 : i32
    %c0_i32_1 = arith.constant 0 : i32
    return %c0_i32, %c0_i32_0 : i32, i32
  }
  func.func @transform_7(%arg0: i32, %arg1: i32, %arg2: i32) -> (i32, i32) {
    %c0_i32 = arith.constant 0 : i32
    return %arg1, %arg2 : i32, i32
  }
  func.func @transform_8(%arg0: i32, %arg1: i32, %arg2: i32) -> (i32, i32, i32) {
    %c0_i32 = arith.constant 0 : i32
    %c0_i32_0 = arith.constant 0 : i32
    return %arg0, %arg1, %c0_i32 : i32, i32, i32
  }
}

</mosaic_0001>

<llo_original>
// kernel: tpu_custom_call.1
$region0: #{tpu_custom_call.1}
  #allocation0 [shape = 'u32[]', space=smem, size = 0x4, offset = 0x4, fixed_abs, tag = 'smem constant byte address 0x4 - core index']
  #allocation1 [shape = 'u32[144,128]{1,0:T(1,128)}', space=vmem, size = 0x12000, scoped, tag = 'internal scratch']
  #allocation2 [shape = 'bf16[4,8,8]{2,1,0:T(8,128)(2,1)}', space=vmem, size = 0x2000, scoped, tag = 'scratch operand']
  #allocation3 [shape = 'f32[4,8,1]{2,1,0:T(8,128)}', space=vmem, size = 0x4000, scoped, tag = 'scratch operand']
  #allocation4 [shape = 'f32[4,8,1]{2,1,0:T(8,128)}', space=vmem, size = 0x4000, scoped, tag = 'scratch operand']
  #allocation5 [shape = 'f32[4,8,8]{2,1,0:T(8,128)}', space=vmem, size = 0x4000, scoped, tag = 'scratch operand']
  %s0 = inlined_call_operand.hbm [shape: bf16[2,8,32], index: 0, kind: input, shape index: {}]
  %s1 = inlined_call_operand.hbm [shape: bf16[2,8,32], index: 1, kind: input, shape index: {}]
  %s2 = inlined_call_operand.hbm [shape: bf16[2,8,32], index: 2, kind: input, shape index: {}]
  %s3 = inlined_call_operand.hbm [shape: bf16[3,32,32], index: 3, kind: input, shape index: {}]
  %s4 = inlined_call_operand.hbm [shape: f32[3,1,32], index: 4, kind: input, shape index: {}]
  %s5 = inlined_call_operand.vmem [shape: bf16[32,32], index: 5, kind: input, shape index: {}]
  %s6 = inlined_call_operand.vmem [shape: f32[1,32], index: 6, kind: input, shape index: {}]
  %s7 = inlined_call_operand.vmem [shape: f32[8,8], index: 7, kind: input, shape index: {}]
  %s8 = inlined_call_operand.hbm [shape: f32[2,8,32], index: 8, kind: output, shape index: {}]
  %s9 = sld [smem:[#allocation0]]
  $region93: #{tpu_custom_call.1} parent=0
    _
  %s11 = ssub.s32 1, %s9
  %s12 = scalar_select 0, %s11, %s9
  $region1: #{tpu_custom_call.1} parent=0
    #allocation6 [shape = 'u8[4096]{0}', space=vmem, size = 0x1000, scoped, tag = 'input window, operand 0']
    #allocation7 [shape = 's32[2]{0}', space=sflag, size = 0x8, scoped, tag = 'scoped memory for tpu_custom_call.1']
    #allocation8 [shape = 's32[2]{0}', space=sflag, size = 0x8, scoped, tag = 'scoped memory for tpu_custom_call.1']
    #allocation9 [shape = 'u8[4096]{0}', space=vmem, size = 0x1000, scoped, tag = 'input window, operand 1']
    #allocation10 [shape = 's32[2]{0}', space=sflag, size = 0x8, scoped, tag = 'scoped memory for tpu_custom_call.1']
    #allocation11 [shape = 'u8[4096]{0}', space=vmem, size = 0x1000, scoped, tag = 'input window, operand 2']
    #allocation12 [shape = 'u8[24576]{0}', space=vmem, size = 0x6000, scoped, tag = 'input window, operand 3, single buffered']
    #allocation13 [shape = 's32[1]{0}', space=sflag, size = 0x4, scoped, tag = 'scoped memory for tpu_custom_call.1']
    #allocation14 [shape = 'u8[1536]{0}', space=vmem, size = 0x800, scoped, tag = 'input window, operand 4, single buffered']
    #allocation15 [shape = 'u8[8192]{0}', space=vmem, size = 0x2000, scoped, tag = 'output window, operand 0']
    %13 = vsyncpa [#allocation7], 0
    %s14 = scalar_lea.sflag [#allocation7], 1
    %15 = vsyncpa %s14, 0
    %16 = vsyncpa [#allocation10], 0
    %s17 = scalar_lea.sflag [#allocation10], 1
    %18 = vsyncpa %s17, 0
    %19 = vsyncpa [#allocation13], 0
    %20 = vsyncpa [#allocation8], 0
    %s21 = scalar_lea.sflag [#allocation8], 1
    %22 = vsyncpa %s21, 0
    loop: start=0, step=1, limit=4
    $region2: #{tpu_custom_call.1} parent=1 // loop_pre_header
      _
    $region3: #{tpu_custom_call.1} parent=1 // loop_header
      %s24 = sphi 0, %s28
      %p25 = scmp.ge.s32.totalorder %s24, 4
      %s31 = sphi 0, %s50
      %s32 = sphi 0, %s46
      %s33 = sphi 0, %s42
      %s34 = sphi 0, %s31
      %s35 = sphi 0, %s32
      %s36 = sphi 0, %s33
      %s37 = sphi 0, %s34
      %s38 = sphi 0, %s35
      %s39 = sphi 0, %s36
      %s55 = sphi 0, %s57
      %s58 = sphi 0, %s55
      %s59 = sphi 0, %s58
      %s75 = sphi 0, %s59
      %s83 = sphi 0, %s85
      %s86 = sphi 0, %s83
      %s87 = sphi 0, %s86
      %s103 = sphi 0, %s87
      %s111 = sphi 0, %s113
      %s114 = sphi 0, %s111
      %s115 = sphi 0, %s114
      %s131 = sphi 0, %s115
      %s135 = sphi 0, %s135
      %s137 = sphi 0, %s135
      %s138 = sphi 0, %s137
      %s152 = sphi 0, %s138
      %s156 = sphi 0, %s156
      %s158 = sphi 0, %s156
      %s159 = sphi 0, %s158
      %s173 = sphi 0, %s159
      %s177 = sphi 0, %s177
      %s179 = sphi 0, %s177
      %s180 = sphi 0, %s179
      %s194 = sphi 0, %s180
      %s198 = sphi 0, %s198
      %s200 = sphi 0, %s198
      %s201 = sphi 0, %s200
      %s215 = sphi 0, %s201
      %s223 = sphi 0, %s225
      %s226 = sphi 0, %s223
      %s227 = sphi 0, %s226
      %s243 = sphi 0, %s227
      %s251 = sphi 0, %s253
      %s254 = sphi 0, %s251
      %s255 = sphi 0, %s254
      %s271 = sphi 0, %s255
    $region4: #{tpu_custom_call.1} parent=1 // loop_header_branch
      %27 = sbr.rel (%p25) target = $region8
    $region5: #{tpu_custom_call.1} parent=1 // loop_body
      %s29 = ssub.s32 %s24, 1
      %s30 = ssub.s32 %s24, 2
      %s40 = sadd.s32 1, %s33
      %p41 = scmp.ge.s32.totalorder %s40, 1
      %s42 = scalar_select %p41, 0, %s40
      %s43 = sadd.s32 1, %s32
      %s44 = scalar_select %p41, %s43, %s32
      %p45 = scmp.ge.s32.totalorder %s44, 1
      %s46 = scalar_select %p45, 0, %s44
      %s47 = sadd.s32 1, %s31
      %s48 = scalar_select %p45, %s47, %s31
      %p49 = scmp.ge.s32.totalorder %s48, 2
      %s50 = scalar_select %p49, 0, %s48
      %s51 = ssub.s32 %s31, %s50
      %s52 = ssub.s32 %s32, %s46
      %s53 = sor.u32 %s51, %s52
      %p54 = scmp.eq.s32.totalorder %s53, 0
      %s56 = sadd.s32 %s55, 1
      %s57 = scalar_select %p54, %s55, %s56
      %p60 = pneg %p54
      %p61 = scmp.eq.s32.totalorder %s24, 1
      %p62 = por %p60, %p61
      %p63 = scmp.ne.s32.totalorder %s55, %s58
      %p64 = scmp.eq.s32.totalorder %s24, 0
      %p65 = por %p63, %p64
      %p66 = scmp.ne.s32.totalorder %s55, %s58
      %p67 = scmp.eq.s32.totalorder %s29, 1
      %p68 = por %p66, %p67
      %p69 = scmp.ne.s32.totalorder %s58, %s59
      %p70 = scmp.eq.s32.totalorder %s29, 0
      %p71 = por %p69, %p70
      %p72 = scmp.ne.s32.totalorder %s58, %s59
      %p73 = scmp.eq.s32.totalorder %s30, 1
      %p74 = por %p72, %p73
      %p76 = scmp.ne.s32.totalorder %s59, %s75
      %p77 = scmp.eq.s32.totalorder %s30, 0
      %p78 = por %p76, %p77
      %s79 = ssub.s32 %s31, %s50
      %s80 = ssub.s32 %s33, %s42
      %s81 = sor.u32 %s79, %s80
      %p82 = scmp.eq.s32.totalorder %s81, 0
      %s84 = sadd.s32 %s83, 1
      %s85 = scalar_select %p82, %s83, %s84
      %p88 = pneg %p82
      %p89 = scmp.eq.s32.totalorder %s24, 1
      %p90 = por %p88, %p89
      %p91 = scmp.ne.s32.totalorder %s83, %s86
      %p92 = scmp.eq.s32.totalorder %s24, 0
      %p93 = por %p91, %p92
      %p94 = scmp.ne.s32.totalorder %s83, %s86
      %p95 = scmp.eq.s32.totalorder %s29, 1
      %p96 = por %p94, %p95
      %p97 = scmp.ne.s32.totalorder %s86, %s87
      %p98 = scmp.eq.s32.totalorder %s29, 0
      %p99 = por %p97, %p98
      %p100 = scmp.ne.s32.totalorder %s86, %s87
      %p101 = scmp.eq.s32.totalorder %s30, 1
      %p102 = por %p100, %p101
      %p104 = scmp.ne.s32.totalorder %s87, %s103
      %p105 = scmp.eq.s32.totalorder %s30, 0
      %p106 = por %p104, %p105
      %s107 = ssub.s32 %s31, %s50
      %s108 = ssub.s32 %s33, %s42
      %s109 = sor.u32 %s107, %s108
      %p110 = scmp.eq.s32.totalorder %s109, 0
      %s112 = sadd.s32 %s111, 1
      %s113 = scalar_select %p110, %s111, %s112
      %p116 = pneg %p110
      %p117 = scmp.eq.s32.totalorder %s24, 1
      %p118 = por %p116, %p117
      %p119 = scmp.ne.s32.totalorder %s111, %s114
      %p120 = scmp.eq.s32.totalorder %s24, 0
      %p121 = por %p119, %p120
      %p122 = scmp.ne.s32.totalorder %s111, %s114
      %p123 = scmp.eq.s32.totalorder %s29, 1
      %p124 = por %p122, %p123
      %p125 = scmp.ne.s32.totalorder %s114, %s115
      %p126 = scmp.eq.s32.totalorder %s29, 0
      %p127 = por %p125, %p126
      %p128 = scmp.ne.s32.totalorder %s114, %s115
      %p129 = scmp.eq.s32.totalorder %s30, 1
      %p130 = por %p128, %p129
      %p132 = scmp.ne.s32.totalorder %s115, %s131
      %p133 = scmp.eq.s32.totalorder %s30, 0
      %p134 = por %p132, %p133
      %s136 = sadd.s32 %s135, 1
      %p139 = scmp.eq.s32.totalorder %s24, 1
      %p140 = scmp.ne.s32.totalorder %s135, %s137
      %p141 = scmp.eq.s32.totalorder %s24, 0
      %p142 = por %p140, %p141
      %p143 = scmp.ne.s32.totalorder %s135, %s137
      %p144 = scmp.eq.s32.totalorder %s29, 1
      %p145 = por %p143, %p144
      %p146 = scmp.ne.s32.totalorder %s137, %s138
      %p147 = scmp.eq.s32.totalorder %s29, 0
      %p148 = por %p146, %p147
      %p149 = scmp.ne.s32.totalorder %s137, %s138
      %p150 = scmp.eq.s32.totalorder %s30, 1
      %p151 = por %p149, %p150
      %p153 = scmp.ne.s32.totalorder %s138, %s152
      %p154 = scmp.eq.s32.totalorder %s30, 0
      %p155 = por %p153, %p154
      %s157 = sadd.s32 %s156, 1
      %p160 = scmp.eq.s32.totalorder %s24, 1
      %p161 = scmp.ne.s32.totalorder %s156, %s158
      %p162 = scmp.eq.s32.totalorder %s24, 0
      %p163 = por %p161, %p162
      %p164 = scmp.ne.s32.totalorder %s156, %s158
      %p165 = scmp.eq.s32.totalorder %s29, 1
      %p166 = por %p164, %p165
      %p167 = scmp.ne.s32.totalorder %s158, %s159
      %p168 = scmp.eq.s32.totalorder %s29, 0
      %p169 = por %p167, %p168
      %p170 = scmp.ne.s32.totalorder %s158, %s159
      %p171 = scmp.eq.s32.totalorder %s30, 1
      %p172 = por %p170, %p171
      %p174 = scmp.ne.s32.totalorder %s159, %s173
      %p175 = scmp.eq.s32.totalorder %s30, 0
      %p176 = por %p174, %p175
      %s178 = sadd.s32 %s177, 1
      %p181 = scmp.eq.s32.totalorder %s24, 1
      %p182 = scmp.ne.s32.totalorder %s177, %s179
      %p183 = scmp.eq.s32.totalorder %s24, 0
      %p184 = por %p182, %p183
      %p185 = scmp.ne.s32.totalorder %s177, %s179
      %p186 = scmp.eq.s32.totalorder %s29, 1
      %p187 = por %p185, %p186
      %p188 = scmp.ne.s32.totalorder %s179, %s180
      %p189 = scmp.eq.s32.totalorder %s29, 0
      %p190 = por %p188, %p189
      %p191 = scmp.ne.s32.totalorder %s179, %s180
      %p192 = scmp.eq.s32.totalorder %s30, 1
      %p193 = por %p191, %p192
      %p195 = scmp.ne.s32.totalorder %s180, %s194
      %p196 = scmp.eq.s32.totalorder %s30, 0
      %p197 = por %p195, %p196
      %s199 = sadd.s32 %s198, 1
      %p202 = scmp.eq.s32.totalorder %s24, 1
      %p203 = scmp.ne.s32.totalorder %s198, %s200
      %p204 = scmp.eq.s32.totalorder %s24, 0
      %p205 = por %p203, %p204
      %p206 = scmp.ne.s32.totalorder %s198, %s200
      %p207 = scmp.eq.s32.totalorder %s29, 1
      %p208 = por %p206, %p207
      %p209 = scmp.ne.s32.totalorder %s200, %s201
      %p210 = scmp.eq.s32.totalorder %s29, 0
      %p211 = por %p209, %p210
      %p212 = scmp.ne.s32.totalorder %s200, %s201
      %p213 = scmp.eq.s32.totalorder %s30, 1
      %p214 = por %p212, %p213
      %p216 = scmp.ne.s32.totalorder %s201, %s215
      %p217 = scmp.eq.s32.totalorder %s30, 0
      %p218 = por %p216, %p217
      %s219 = ssub.s32 %s32, %s46
      %s220 = ssub.s32 %s33, %s42
      %s221 = sor.u32 %s219, %s220
      %p222 = scmp.eq.s32.totalorder %s221, 0
      %s224 = sadd.s32 %s223, 1
      %s225 = scalar_select %p222, %s223, %s224
      %p228 = pneg %p222
      %p229 = scmp.eq.s32.totalorder %s24, 1
      %p230 = por %p228, %p229
      %p231 = scmp.ne.s32.totalorder %s223, %s226
      %p232 = scmp.eq.s32.totalorder %s24, 0
      %p233 = por %p231, %p232
      %p234 = scmp.ne.s32.totalorder %s223, %s226
      %p235 = scmp.eq.s32.totalorder %s29, 1
      %p236 = por %p234, %p235
      %p237 = scmp.ne.s32.totalorder %s226, %s227
      %p238 = scmp.eq.s32.totalorder %s29, 0
      %p239 = por %p237, %p238
      %p240 = scmp.ne.s32.totalorder %s226, %s227
      %p241 = scmp.eq.s32.totalorder %s30, 1
      %p242 = por %p240, %p241
      %p244 = scmp.ne.s32.totalorder %s227, %s243
      %p245 = scmp.eq.s32.totalorder %s30, 0
      %p246 = por %p244, %p245
      %s247 = ssub.s32 %s31, %s50
      %s248 = ssub.s32 %s32, %s46
      %s249 = sor.u32 %s247, %s248
      %p250 = scmp.eq.s32.totalorder %s249, 0
      %s252 = sadd.s32 %s251, 1
      %s253 = scalar_select %p250, %s251, %s252
      %p256 = pneg %p250
      %p257 = scmp.eq.s32.totalorder %s24, 1
      %p258 = por %p256, %p257
      %p259 = scmp.ne.s32.totalorder %s251, %s254
      %p260 = scmp.eq.s32.totalorder %s24, 0
      %p261 = por %p259, %p260
      %p262 = scmp.ne.s32.totalorder %s251, %s254
      %p263 = scmp.eq.s32.totalorder %s29, 1
      %p264 = por %p262, %p263
      %p265 = scmp.ne.s32.totalorder %s254, %s255
      %p266 = scmp.eq.s32.totalorder %s29, 0
      %p267 = por %p265, %p266
      %p268 = scmp.ne.s32.totalorder %s254, %s255
      %p269 = scmp.eq.s32.totalorder %s30, 1
      %p270 = por %p268, %p269
      %p272 = scmp.ne.s32.totalorder %s255, %s271
      %p273 = scmp.eq.s32.totalorder %s30, 0
      %p274 = por %p272, %p273
      %p275 = scmp.le.s32.totalorder 1, %s24
      %p276 = scmp.lt.s32.totalorder %s24, 3
      %p277 = pnand %p275, %p276
      %p278 = pneg %p277
      // Predicated region
      $region9: #{tpu_custom_call.1} parent=5 // pred_check
        _
      $region10: #{tpu_custom_call.1} parent=5 // pred_check_branch
        %280 = sbr.rel (%p277) target = $region12
      $region11: #{tpu_custom_call.1} parent=5 // pred_region
        %s281 = ssub.s32 %s24, 1
        // Predicated region
        $region13: #{tpu_custom_call.1} parent=11 // pred_check
          %p282 = pneg %p148
        $region14: #{tpu_custom_call.1} parent=11 // pred_check_branch
          %284 = sbr.rel (%p282) target = $region16
        $region15: #{tpu_custom_call.1} parent=11 // pred_region
          %s286 = ssub.s32 768, 768
          %287 = vsyncadd [#allocation13], %s286
          %s288 = sshll.u32 [#allocation12], 4
          %s289 = int_to_ptr.vmem [resolvable:$true] %s288
          %294 = dma.hbm_to_vmem [thread:$0]  %s3, 768, %s289, [#allocation13], 64, 64, 4
        $region16: #{tpu_custom_call.1} parent=11 // pred_fallthru
          _
        // Predicated region
        $region17: #{tpu_custom_call.1} parent=11 // pred_check
          %p295 = pneg %p169
        $region18: #{tpu_custom_call.1} parent=11 // pred_check_branch
          %297 = sbr.rel (%p295) target = $region20
        $region19: #{tpu_custom_call.1} parent=11 // pred_region
          %s299 = ssub.s32 48, 48
          %300 = vsyncadd [#allocation13], %s299
          %s301 = sshll.u32 [#allocation14], 4
          %s302 = int_to_ptr.vmem [resolvable:$true] %s301
          %307 = dma.hbm_to_vmem [thread:$0]  %s4, 48, %s302, [#allocation13], 16, 16, 1
        $region20: #{tpu_custom_call.1} parent=11 // pred_fallthru
          _
        // Predicated region
        $region21: #{tpu_custom_call.1} parent=11 // pred_check
          %p308 = pneg %p190
        $region22: #{tpu_custom_call.1} parent=11 // pred_check_branch
          %310 = sbr.rel (%p308) target = $region24
        $region23: #{tpu_custom_call.1} parent=11 // pred_region
          _
        $region24: #{tpu_custom_call.1} parent=11 // pred_fallthru
          _
        // Predicated region
        $region25: #{tpu_custom_call.1} parent=11 // pred_check
          %p311 = pneg %p211
        $region26: #{tpu_custom_call.1} parent=11 // pred_check_branch
          %313 = sbr.rel (%p311) target = $region28
        $region27: #{tpu_custom_call.1} parent=11 // pred_region
          _
        $region28: #{tpu_custom_call.1} parent=11 // pred_fallthru
          _
        // Predicated region
        $region29: #{tpu_custom_call.1} parent=11 // pred_check
          %p314 = pneg %p239
        $region30: #{tpu_custom_call.1} parent=11 // pred_check_branch
          %316 = sbr.rel (%p314) target = $region32
        $region31: #{tpu_custom_call.1} parent=11 // pred_region
          %p317 = scmp.lt.s32.totalorder %s35, 0
          %s318 = scalar_select %p317, %s35, 0
          %p319 = scmp.lt.s32.totalorder %s36, 0
          %s320 = scalar_select %p319, %s36, 0
          %s321 = sadd.s32 %s320, %s318
          %s322 = smul.addr %s321, 8
          %s323 = scalar_lea.vmem %s7, %s322
        $region32: #{tpu_custom_call.1} parent=11 // pred_fallthru
          _
      $region12: #{tpu_custom_call.1} parent=5 // pred_fallthru
        _
      %p324 = scmp.lt.s32.totalorder %s24, 2
      // Predicated region
      $region33: #{tpu_custom_call.1} parent=5 // pred_check
        %p325 = pneg %p324
      $region34: #{tpu_custom_call.1} parent=5 // pred_check_branch
        %327 = sbr.rel (%p325) target = $region36
      $region35: #{tpu_custom_call.1} parent=5 // pred_region
        // Predicated region
        $region37: #{tpu_custom_call.1} parent=35 // pred_check
          %p328 = pneg %p65
        $region38: #{tpu_custom_call.1} parent=35 // pred_check_branch
          %330 = sbr.rel (%p328) target = $region40
        $region39: #{tpu_custom_call.1} parent=35 // pred_region
          %s331 = sand.u32 %s55, 1
          %s332 = scalar_lea.sflag [#allocation7], %s331
          %s333 = sand.u32 %s55, 1
          %s334 = smul.addr %s333, 4
          %s335 = scalar_lea.vmem [#allocation6], %s334
          %s337 = ssub.s32 64, 64
          %338 = vsyncadd %s332, %s337
          %s339 = sadd.s32 %s32, %s31
          %s340 = smul.addr %s339, 64
          %s341 = scalar_lea.hbm %s0, %s340
          %s343 = sshll.u32 %s335, 4
          %s344 = int_to_ptr.vmem [resolvable:$true] %s343
          %346 = dma.hbm_to_vmem [thread:$0]  %s341, 64, %s344, %s332
        $region40: #{tpu_custom_call.1} parent=35 // pred_fallthru
          _
        // Predicated region
        $region41: #{tpu_custom_call.1} parent=35 // pred_check
          %p347 = pneg %p93
        $region42: #{tpu_custom_call.1} parent=35 // pred_check_branch
          %349 = sbr.rel (%p347) target = $region44
        $region43: #{tpu_custom_call.1} parent=35 // pred_region
          %s350 = sand.u32 %s24, 1
          %s351 = scalar_lea.sflag [#allocation10], %s350
          %s352 = sand.u32 %s83, 1
          %s353 = smul.addr %s352, 4
          %s354 = scalar_lea.vmem [#allocation9], %s353
          %s356 = ssub.s32 64, 64
          %357 = vsyncadd %s351, %s356
          %s358 = sadd.s32 %s33, %s31
          %s359 = smul.addr %s358, 64
          %s360 = scalar_lea.hbm %s1, %s359
          %s362 = sshll.u32 %s354, 4
          %s363 = int_to_ptr.vmem [resolvable:$true] %s362
          %365 = dma.hbm_to_vmem [thread:$0]  %s360, 64, %s363, %s351
        $region44: #{tpu_custom_call.1} parent=35 // pred_fallthru
          _
        // Predicated region
        $region45: #{tpu_custom_call.1} parent=35 // pred_check
          %p366 = pneg %p121
        $region46: #{tpu_custom_call.1} parent=35 // pred_check_branch
          %368 = sbr.rel (%p366) target = $region48
        $region47: #{tpu_custom_call.1} parent=35 // pred_region
          %s369 = sand.u32 %s24, 1
          %s370 = scalar_lea.sflag [#allocation10], %s369
          %s371 = sand.u32 %s111, 1
          %s372 = smul.addr %s371, 4
          %s373 = scalar_lea.vmem [#allocation11], %s372
          %s375 = ssub.s32 64, 64
          %376 = vsyncadd %s370, %s375
          %s377 = sadd.s32 %s33, %s31
          %s378 = smul.addr %s377, 64
          %s379 = scalar_lea.hbm %s2, %s378
          %s381 = sshll.u32 %s373, 4
          %s382 = int_to_ptr.vmem [resolvable:$true] %s381
          %384 = dma.hbm_to_vmem [thread:$0]  %s379, 64, %s382, %s370
        $region48: #{tpu_custom_call.1} parent=35 // pred_fallthru
          _
      $region36: #{tpu_custom_call.1} parent=5 // pred_fallthru
        _
      %p385 = scmp.le.s32.totalorder 1, %s24
      %p386 = scmp.lt.s32.totalorder %s24, 3
      %p387 = pnand %p385, %p386
      %p388 = pneg %p387
      // Predicated region
      $region49: #{tpu_custom_call.1} parent=5 // pred_check
        _
      $region50: #{tpu_custom_call.1} parent=5 // pred_check_branch
        %390 = sbr.rel (%p387) target = $region52
      $region51: #{tpu_custom_call.1} parent=5 // pred_region
        %s391 = ssub.s32 %s24, 1
        %s392 = sand.u32 %s58, 1
        %s393 = scalar_lea.sflag [#allocation7], %s392
        %s394 = sand.u32 %s58, 1
        %s395 = smul.addr %s394, 4
        %s396 = scalar_lea.vmem [#allocation6], %s395
        // Predicated region
        $region53: #{tpu_custom_call.1} parent=51 // pred_check
          %p397 = pneg %p71
        $region54: #{tpu_custom_call.1} parent=51 // pred_check_branch
          %399 = sbr.rel (%p397) target = $region56
        $region55: #{tpu_custom_call.1} parent=51 // pred_region
          %400 = dma.done %s393, 64
        $region56: #{tpu_custom_call.1} parent=51 // pred_fallthru
          _
        %s401 = sand.u32 %s29, 1
        %s402 = scalar_lea.sflag [#allocation10], %s401
        %s403 = sand.u32 %s86, 1
        %s404 = smul.addr %s403, 4
        %s405 = scalar_lea.vmem [#allocation9], %s404
        // Predicated region
        $region57: #{tpu_custom_call.1} parent=51 // pred_check
          %p406 = pneg %p99
        $region58: #{tpu_custom_call.1} parent=51 // pred_check_branch
          %408 = sbr.rel (%p406) target = $region60
        $region59: #{tpu_custom_call.1} parent=51 // pred_region
          %409 = dma.done %s402, 64
        $region60: #{tpu_custom_call.1} parent=51 // pred_fallthru
          _
        %s410 = sand.u32 %s29, 1
        %s411 = scalar_lea.sflag [#allocation10], %s410
        %s412 = sand.u32 %s114, 1
        %s413 = smul.addr %s412, 4
        %s414 = scalar_lea.vmem [#allocation11], %s413
        // Predicated region
        $region61: #{tpu_custom_call.1} parent=51 // pred_check
          %p415 = pneg %p127
        $region62: #{tpu_custom_call.1} parent=51 // pred_check_branch
          %417 = sbr.rel (%p415) target = $region64
        $region63: #{tpu_custom_call.1} parent=51 // pred_region
          %418 = dma.done %s411, 64
        $region64: #{tpu_custom_call.1} parent=51 // pred_fallthru
          _
        // Predicated region
        $region65: #{tpu_custom_call.1} parent=51 // pred_check
          %p419 = pneg %p148
        $region66: #{tpu_custom_call.1} parent=51 // pred_check_branch
          %421 = sbr.rel (%p419) target = $region68
        $region67: #{tpu_custom_call.1} parent=51 // pred_region
          %422 = dma.done [#allocation13], 768
        $region68: #{tpu_custom_call.1} parent=51 // pred_fallthru
          _
        // Predicated region
        $region69: #{tpu_custom_call.1} parent=51 // pred_check
          %p423 = pneg %p169
        $region70: #{tpu_custom_call.1} parent=51 // pred_check_branch
          %425 = sbr.rel (%p423) target = $region72
        $region71: #{tpu_custom_call.1} parent=51 // pred_region
          %426 = dma.done [#allocation13], 48
        $region72: #{tpu_custom_call.1} parent=51 // pred_fallthru
          _
        %s427 = sand.u32 %s58, 1
        %s428 = scalar_lea.sflag [#allocation7], %s427
        %s429 = sand.u32 %s58, 1
        %s430 = smul.addr %s429, 4
        %s431 = scalar_lea.vmem [#allocation6], %s430
        %p432 = pneg %p71
        %p433 = pneg %p68
        %s434 = sand.u32 %s29, 1
        %s435 = scalar_lea.sflag [#allocation10], %s434
        %s436 = sand.u32 %s86, 1
        %s437 = smul.addr %s436, 4
        %s438 = scalar_lea.vmem [#allocation9], %s437
        %p439 = pneg %p99
        %p440 = pneg %p96
        %s441 = sand.u32 %s29, 1
        %s442 = scalar_lea.sflag [#allocation10], %s441
        %s443 = sand.u32 %s114, 1
        %s444 = smul.addr %s443, 4
        %s445 = scalar_lea.vmem [#allocation11], %s444
        %p446 = pneg %p127
        %p447 = pneg %p124
        %p448 = pneg %p148
        %p449 = pneg %p145
        %p450 = pneg %p169
        %p451 = pneg %p166
        %p452 = pneg %p190
        %p453 = pneg %p187
        %p454 = pneg %p211
        %p455 = pneg %p208
        %p456 = scmp.lt.s32.totalorder %s35, 0
        %s457 = scalar_select %p456, %s35, 0
        %p458 = scmp.lt.s32.totalorder %s36, 0
        %s459 = scalar_select %p458, %s36, 0
        %s460 = sadd.s32 %s459, %s457
        %s461 = smul.addr %s460, 8
        %s462 = scalar_lea.vmem %s7, %s461
        %p463 = pneg %p239
        %p464 = pneg %p236
        %p465 = pneg %p267
        %p466 = pneg %p264
        %s467 = sand.u32 %s254, 1
        %s468 = scalar_lea.sflag [#allocation8], %s467
        %s469 = sand.u32 %s254, 1
        %s470 = smul.addr %s469, 8
        %s471 = scalar_lea.vmem [#allocation15], %s470
        %p472 = scmp.lt.s32.totalorder %s35, 0
        %s473 = scalar_select %p472, %s35, 0
        %p474 = scmp.lt.s32.totalorder %s36, 0
        %s475 = scalar_select %p474, %s36, 0
        %s476 = sadd.s32 %s475, %s473
        %s477 = smul.addr %s476, 8
        %s478 = scalar_lea.vmem %s7, %s477
        %p480 = scmp.eq.s32.totalorder %s36, 0
        // Predicated region
        $region73: #{tpu_custom_call.1} parent=51 // pred_check
          %p481 = pneg %p480
        $region74: #{tpu_custom_call.1} parent=51 // pred_check_branch
          %483 = sbr.rel (%p481) target = $region76
        $region75: #{tpu_custom_call.1} parent=51 // pred_region
          %v484 = vld [vmem:[%s396] sm:$0xf]
          %v485 = vld [vmem:[#allocation12] sm:$0xf]
          %v486 = vld [vmem:[#allocation12 + $0x4] sm:$0xf]
          %v487 = vld [vmem:[#allocation12 + $0x8] sm:$0xf]
          %v488 = vld [vmem:[#allocation12 + $0xc] sm:$0xf]
          %v489 = vld [vmem:[#allocation14] sm:$0x1]
          %v491 = vlaneseq
          %v492 = vshrl.u32 %v491, 7
          %v493 = vsub.s32 0, %v492
          %v494 = vrot.slane %v489, %v493
          %v500 = vunpack.c.l.b16 %v485
          %v501 = vunpack.c.l.b16 %v486
          %v502 = vunpack.c.l.b16 %v487
          %v503 = vunpack.c.l.b16 %v488
          %v504 = vpack.c.b16 %v501, %v500
          %v505 = vpack.c.b16 %v503, %v502
          %vm508 = vcmask 261120
          %v510 = vsel %vm508, %v484, 0
          %512 = vmatprep.subr.bf16.mxu0 0
          %513 = vmatpush1.bf16.msra.mxu0 %v504
          %514 = vmatprep.subr.bf16.mxu0 0
          %515 = vmatpush1.bf16.msra.mxu0 %v505
          %516 = vmatprep.subr.bf16.mxu0 0
          %517 = vmatpush1.bf16.msra.mxu0 0
          %518 = vmatprep.subr.bf16.mxu0 0
          %519 = vmatpush1.bf16.msra.mxu0 0
          %520 = vmatprep.subr.bf16.mxu0 0
          %521 = vmatpush1.bf16.msra.mxu0 0
          %522 = vmatprep.subr.bf16.mxu0 0
          %523 = vmatpush1.bf16.msra.mxu0 0
          %524 = vmatprep.subr.bf16.mxu0 0
          %525 = vmatpush1.bf16.msra.mxu0 0
          %526 = vmatprep.subr.bf16.mxu0 0
          %527 = vmatpush1.bf16.msra.mxu0 0
          %528 = vmatprep.subr.bf16.mxu0 0
          %529 = vmatpush1.bf16.msra.mxu0 0
          %530 = vmatprep.subr.bf16.mxu0 0
          %531 = vmatpush1.bf16.msra.mxu0 0
          %532 = vmatprep.subr.bf16.mxu0 0
          %533 = vmatpush1.bf16.msra.mxu0 0
          %534 = vmatprep.subr.bf16.mxu0 0
          %535 = vmatpush1.bf16.msra.mxu0 0
          %536 = vmatprep.subr.bf16.mxu0 0
          %537 = vmatpush1.bf16.msra.mxu0 0
          %538 = vmatprep.subr.bf16.mxu0 0
          %539 = vmatpush1.bf16.msra.mxu0 0
          %540 = vmatprep.subr.bf16.mxu0 0
          %541 = vmatpush1.bf16.msra.mxu0 0
          %542 = vmatprep.subr.bf16.mxu0 0
          %543 = vmatpush1.bf16.msra.mxu0 0
          %544 = vmatprep.mubr.bf16.mxu0 0
          %545 = vmatmul.mubr.bf16.gmra.mrb[0].mxu0 %v510
          %v546 = vpop.f32.mrb[0].mxu0
          %v547 = vadd.f32 %v494, %v546
          %v548 = vpop.f32.mrb[0].mxu0
          %v549 = vpop.f32.mrb[0].mxu0
          %v550 = vpop.f32.mrb[0].mxu0
          %551 = vdwg.mxu0
          %553 = vrot.lane.b32.xlu0 %v547, 120
          %v554 = vpop.permute.xlu0 %553
          %556 = vrot.lane.b32.xlu0 %v547, 112
          %v557 = vpop.permute.xlu0 %556
          %559 = vrot.lane.b32.xlu0 %v547, 104
          %v560 = vpop.permute.xlu0 %559
          %v562 = vcombine.low %v547, %v557
          %v563 = vcombine.high %v547, %v557
          %v565 = vunpack.c.l.s4 1983009808
          %v566 = vunpack.c.0.s8 %v565
          %v567 = vlaneseq
          %v568 = vshrl.u32 %v567, 7
          %v569 = vsub.s32 %v566, %v568
          %v570 = vrot.slane %v562, %v569
          %v572 = vunpack.c.l.s4 1983009808
          %v573 = vunpack.c.0.s8 %v572
          %v574 = vlaneseq
          %v575 = vshrl.u32 %v574, 7
          %v576 = vsub.s32 %v573, %v575
          %v577 = vrot.slane %v563, %v576
          %v578 = vcombine.low %v554, %v560
          %v579 = vcombine.high %v554, %v560
          %v581 = vunpack.c.l.s4 1983009808
          %v582 = vunpack.c.0.s8 %v581
          %v583 = vlaneseq
          %v584 = vshrl.u32 %v583, 7
          %v585 = vsub.s32 %v582, %v584
          %v586 = vrot.slane %v578, %v585
          %v588 = vunpack.c.l.s4 1983009808
          %v589 = vunpack.c.0.s8 %v588
          %v590 = vlaneseq
          %v591 = vshrl.u32 %v590, 7
          %v592 = vsub.s32 %v589, %v591
          %v593 = vrot.slane %v579, %v592
          %v594 = vcombine.low %v570, %v586
          %v595 = vcombine.high %v570, %v586
          %v597 = vunpack.c.l.s4 1934713408
          %v598 = vunpack.c.0.s8 %v597
          %v599 = vlaneseq
          %v600 = vshrl.u32 %v599, 7
          %v601 = vsub.s32 %v598, %v600
          %v602 = vrot.slane %v594, %v601
          %v604 = vunpack.c.l.s4 1934713408
          %v605 = vunpack.c.0.s8 %v604
          %v606 = vlaneseq
          %v607 = vshrl.u32 %v606, 7
          %v608 = vsub.s32 %v605, %v607
          %v609 = vrot.slane %v595, %v608
          %v610 = vcombine.low %v577, %v593
          %v611 = vcombine.high %v577, %v593
          %v613 = vunpack.c.l.s4 1934713408
          %v614 = vunpack.c.0.s8 %v613
          %v615 = vlaneseq
          %v616 = vshrl.u32 %v615, 7
          %v617 = vsub.s32 %v614, %v616
          %v618 = vrot.slane %v610, %v617
          %v620 = vunpack.c.l.s4 1934713408
          %v621 = vunpack.c.0.s8 %v620
          %v622 = vlaneseq
          %v623 = vshrl.u32 %v622, 7
          %v624 = vsub.s32 %v621, %v623
          %v625 = vrot.slane %v611, %v624
          %v626 = vcombine.high %v602, 0.0
          %v627 = vcombine.high %v609, 0.0
          %v628 = vcombine.high %v618, 0.0
          %v629 = vcombine.high %v625, 0.0
          %v630 = vcombine.low %v602, %v609
          %v632 = vunpack.c.l.s4 1983009808
          %v633 = vunpack.c.0.s8 %v632
          %v634 = vlaneseq
          %v635 = vshrl.u32 %v634, 7
          %v636 = vsub.s32 %v633, %v635
          %v637 = vrot.slane %v630, %v636
          %v638 = vcombine.low %v626, %v627
          %v640 = vunpack.c.l.s4 1983009808
          %v641 = vunpack.c.0.s8 %v640
          %v642 = vlaneseq
          %v643 = vshrl.u32 %v642, 7
          %v644 = vsub.s32 %v641, %v643
          %v645 = vrot.slane %v638, %v644
          %v646 = vcombine.low %v618, %v625
          %v648 = vunpack.c.l.s4 1983009808
          %v649 = vunpack.c.0.s8 %v648
          %v650 = vlaneseq
          %v651 = vshrl.u32 %v650, 7
          %v652 = vsub.s32 %v649, %v651
          %v653 = vrot.slane %v646, %v652
          %v654 = vcombine.low %v628, %v629
          %v656 = vunpack.c.l.s4 1983009808
          %v657 = vunpack.c.0.s8 %v656
          %v658 = vlaneseq
          %v659 = vshrl.u32 %v658, 7
          %v660 = vsub.s32 %v657, %v659
          %v661 = vrot.slane %v654, %v660
          %v662 = vcombine.low %v637, %v645
          %v663 = vcombine.high %v637, %v645
          %v665 = vunpack.c.l.s4 1934713408
          %v666 = vunpack.c.0.s8 %v665
          %v667 = vlaneseq
          %v668 = vshrl.u32 %v667, 7
          %v669 = vsub.s32 %v666, %v668
          %v670 = vrot.slane %v662, %v669
          %v672 = vunpack.c.l.s4 1934713408
          %v673 = vunpack.c.0.s8 %v672
          %v674 = vlaneseq
          %v675 = vshrl.u32 %v674, 7
          %v676 = vsub.s32 %v673, %v675
          %v677 = vrot.slane %v663, %v676
          %v678 = vcombine.low %v653, %v661
          %v679 = vcombine.high %v653, %v661
          %v681 = vunpack.c.l.s4 1934713408
          %v682 = vunpack.c.0.s8 %v681
          %v683 = vlaneseq
          %v684 = vshrl.u32 %v683, 7
          %v685 = vsub.s32 %v682, %v684
          %v686 = vrot.slane %v678, %v685
          %v688 = vunpack.c.l.s4 1934713408
          %v689 = vunpack.c.0.s8 %v688
          %v690 = vlaneseq
          %v691 = vshrl.u32 %v690, 7
          %v692 = vsub.s32 %v689, %v691
          %v693 = vrot.slane %v679, %v692
          %v694 = vcombine.low %v670, %v686
          %v695 = vcombine.high %v670, %v686
          %v696 = vcombine.low %v677, %v693
          %v697 = vcombine.high %v677, %v693
          %v698 = vpack.c.bf16 %v694, %v694
          %v699 = vpack.c.bf16 %v695, %v695
          %v700 = vpack.c.bf16 %v696, %v696
          %v701 = vpack.c.bf16 %v697, %v697
          %vm702 = vcmask 60416
          %703 = vst.msk [vmem:[#allocation2] sm:$0xf] %vm702, %v698
          %704 = vst.msk [vmem:[#allocation2 + $0x4] sm:$0xf] %vm702, %v699
          %705 = vst.msk [vmem:[#allocation2 + $0x8] sm:$0xf] %vm702, %v700
          %706 = vst.msk [vmem:[#allocation2 + $0xc] sm:$0xf] %vm702, %v701
          %vm707 = vcmask 7168
          %708 = vst.msk [vmem:[#allocation3] sm:$0xff] %vm707, -inf
          %709 = vst.msk [vmem:[#allocation3 + $0x8] sm:$0xff] %vm707, -inf
          %710 = vst.msk [vmem:[#allocation3 + $0x10] sm:$0xff] %vm707, -inf
          %711 = vst.msk [vmem:[#allocation3 + $0x18] sm:$0xff] %vm707, -inf
          %712 = vst.msk [vmem:[#allocation4] sm:$0xff] %vm707, 0.0
          %713 = vst.msk [vmem:[#allocation4 + $0x8] sm:$0xff] %vm707, 0.0
          %714 = vst.msk [vmem:[#allocation4 + $0x10] sm:$0xff] %vm707, 0.0
          %715 = vst.msk [vmem:[#allocation4 + $0x18] sm:$0xff] %vm707, 0.0
          %vm716 = vcmask 64512
          %717 = vst.msk [vmem:[#allocation5] sm:$0xff] %vm716, 0.0
          %718 = vst.msk [vmem:[#allocation5 + $0x8] sm:$0xff] %vm716, 0.0
          %719 = vst.msk [vmem:[#allocation5 + $0x10] sm:$0xff] %vm716, 0.0
          %720 = vst.msk [vmem:[#allocation5 + $0x18] sm:$0xff] %vm716, 0.0
        $region76: #{tpu_custom_call.1} parent=51 // pred_fallthru
          _
        %v721 = vld [vmem:[%s405] sm:$0xf]
        %s722 = scalar_lea.vmem [#allocation12], 16
        %v723 = vld [vmem:[%s722] sm:$0xf]
        %v724 = vld [vmem:[%s722 + $0x4] sm:$0xf]
        %v725 = vld [vmem:[%s722 + $0x8] sm:$0xf]
        %v726 = vld [vmem:[%s722 + $0xc] sm:$0xf]
        %s727 = scalar_lea.vmem [#allocation14], 1
        %v728 = vld [vmem:[%s727] sm:$0x1]
        %v730 = vlaneseq
        %v731 = vshrl.u32 %v730, 7
        %v732 = vsub.s32 0, %v731
        %v733 = vrot.slane %v728, %v732
        %v739 = vunpack.c.l.b16 %v723
        %v740 = vunpack.c.l.b16 %v724
        %v741 = vunpack.c.l.b16 %v725
        %v742 = vunpack.c.l.b16 %v726
        %v743 = vpack.c.b16 %v740, %v739
        %v744 = vpack.c.b16 %v742, %v741
        %vm747 = vcmask 261120
        %v749 = vsel %vm747, %v721, 0
        %751 = vmatprep.subr.bf16.mxu0 0
        %752 = vmatpush1.bf16.msra.mxu0 %v743
        %753 = vmatprep.subr.bf16.mxu0 0
        %754 = vmatpush1.bf16.msra.mxu0 %v744
        %755 = vmatprep.subr.bf16.mxu0 0
        %756 = vmatpush1.bf16.msra.mxu0 0
        %757 = vmatprep.subr.bf16.mxu0 0
        %758 = vmatpush1.bf16.msra.mxu0 0
        %759 = vmatprep.subr.bf16.mxu0 0
        %760 = vmatpush1.bf16.msra.mxu0 0
        %761 = vmatprep.subr.bf16.mxu0 0
        %762 = vmatpush1.bf16.msra.mxu0 0
        %763 = vmatprep.subr.bf16.mxu0 0
        %764 = vmatpush1.bf16.msra.mxu0 0
        %765 = vmatprep.subr.bf16.mxu0 0
        %766 = vmatpush1.bf16.msra.mxu0 0
        %767 = vmatprep.subr.bf16.mxu0 0
        %768 = vmatpush1.bf16.msra.mxu0 0
        %769 = vmatprep.subr.bf16.mxu0 0
        %770 = vmatpush1.bf16.msra.mxu0 0
        %771 = vmatprep.subr.bf16.mxu0 0
        %772 = vmatpush1.bf16.msra.mxu0 0
        %773 = vmatprep.subr.bf16.mxu0 0
        %774 = vmatpush1.bf16.msra.mxu0 0
        %775 = vmatprep.subr.bf16.mxu0 0
        %776 = vmatpush1.bf16.msra.mxu0 0
        %777 = vmatprep.subr.bf16.mxu0 0
        %778 = vmatpush1.bf16.msra.mxu0 0
        %779 = vmatprep.subr.bf16.mxu0 0
        %780 = vmatpush1.bf16.msra.mxu0 0
        %781 = vmatprep.subr.bf16.mxu0 0
        %782 = vmatpush1.bf16.msra.mxu0 0
        %783 = vmatprep.mubr.bf16.mxu0 0
        %784 = vmatmul.mubr.bf16.gmra.mrb[0].mxu0 %v749
        %v785 = vpop.f32.mrb[0].mxu0
        %v786 = vadd.f32 %v733, %v785
        %v787 = vpop.f32.mrb[0].mxu0
        %v788 = vpop.f32.mrb[0].mxu0
        %v789 = vpop.f32.mrb[0].mxu0
        %790 = vdwg.mxu0
        %v791 = vld [vmem:[%s414] sm:$0xf]
        %s792 = scalar_lea.vmem [#allocation12], 32
        %v793 = vld [vmem:[%s792] sm:$0xf]
        %v794 = vld [vmem:[%s792 + $0x4] sm:$0xf]
        %v795 = vld [vmem:[%s792 + $0x8] sm:$0xf]
        %v796 = vld [vmem:[%s792 + $0xc] sm:$0xf]
        %s797 = scalar_lea.vmem [#allocation14], 2
        %v798 = vld [vmem:[%s797] sm:$0x1]
        %v800 = vlaneseq
        %v801 = vshrl.u32 %v800, 7
        %v802 = vsub.s32 0, %v801
        %v803 = vrot.slane %v798, %v802
        %v809 = vunpack.c.l.b16 %v793
        %v810 = vunpack.c.l.b16 %v794
        %v811 = vunpack.c.l.b16 %v795
        %v812 = vunpack.c.l.b16 %v796
        %v813 = vpack.c.b16 %v810, %v809
        %v814 = vpack.c.b16 %v812, %v811
        %v818 = vsel %vm747, %v791, 0
        %820 = vmatprep.subr.bf16.mxu0 0
        %821 = vmatpush1.bf16.msra.mxu0 %v813
        %822 = vmatprep.subr.bf16.mxu0 0
        %823 = vmatpush1.bf16.msra.mxu0 %v814
        %824 = vmatprep.subr.bf16.mxu0 0
        %825 = vmatpush1.bf16.msra.mxu0 0
        %826 = vmatprep.subr.bf16.mxu0 0
        %827 = vmatpush1.bf16.msra.mxu0 0
        %828 = vmatprep.subr.bf16.mxu0 0
        %829 = vmatpush1.bf16.msra.mxu0 0
        %830 = vmatprep.subr.bf16.mxu0 0
        %831 = vmatpush1.bf16.msra.mxu0 0
        %832 = vmatprep.subr.bf16.mxu0 0
        %833 = vmatpush1.bf16.msra.mxu0 0
        %834 = vmatprep.subr.bf16.mxu0 0
        %835 = vmatpush1.bf16.msra.mxu0 0
        %836 = vmatprep.subr.bf16.mxu0 0
        %837 = vmatpush1.bf16.msra.mxu0 0
        %838 = vmatprep.subr.bf16.mxu0 0
        %839 = vmatpush1.bf16.msra.mxu0 0
        %840 = vmatprep.subr.bf16.mxu0 0
        %841 = vmatpush1.bf16.msra.mxu0 0
        %842 = vmatprep.subr.bf16.mxu0 0
        %843 = vmatpush1.bf16.msra.mxu0 0
        %844 = vmatprep.subr.bf16.mxu0 0
        %845 = vmatpush1.bf16.msra.mxu0 0
        %846 = vmatprep.subr.bf16.mxu0 0
        %847 = vmatpush1.bf16.msra.mxu0 0
        %848 = vmatprep.subr.bf16.mxu0 0
        %849 = vmatpush1.bf16.msra.mxu0 0
        %850 = vmatprep.subr.bf16.mxu0 0
        %851 = vmatpush1.bf16.msra.mxu0 0
        %852 = vmatprep.mubr.bf16.mxu0 0
        %853 = vmatmul.mubr.bf16.gmra.mrb[0].mxu0 %v818
        %v854 = vpop.f32.mrb[0].mxu0
        %v855 = vadd.f32 %v803, %v854
        %v856 = vpop.f32.mrb[0].mxu0
        %v857 = vpop.f32.mrb[0].mxu0
        %v858 = vpop.f32.mrb[0].mxu0
        %859 = vdwg.mxu0
        %861 = vrot.lane.b32.xlu0 %v786, 120
        %v862 = vpop.permute.xlu0 %861
        %864 = vrot.lane.b32.xlu0 %v786, 112
        %v865 = vpop.permute.xlu0 %864
        %867 = vrot.lane.b32.xlu0 %v786, 104
        %v868 = vpop.permute.xlu0 %867
        %v870 = vcombine.low %v786, %v865
        %v871 = vcombine.high %v786, %v865
        %v873 = vunpack.c.l.s4 1983009808
        %v874 = vunpack.c.0.s8 %v873
        %v875 = vlaneseq
        %v876 = vshrl.u32 %v875, 7
        %v877 = vsub.s32 %v874, %v876
        %v878 = vrot.slane %v870, %v877
        %v880 = vunpack.c.l.s4 1983009808
        %v881 = vunpack.c.0.s8 %v880
        %v882 = vlaneseq
        %v883 = vshrl.u32 %v882, 7
        %v884 = vsub.s32 %v881, %v883
        %v885 = vrot.slane %v871, %v884
        %v886 = vcombine.low %v862, %v868
        %v887 = vcombine.high %v862, %v868
        %v889 = vunpack.c.l.s4 1983009808
        %v890 = vunpack.c.0.s8 %v889
        %v891 = vlaneseq
        %v892 = vshrl.u32 %v891, 7
        %v893 = vsub.s32 %v890, %v892
        %v894 = vrot.slane %v886, %v893
        %v896 = vunpack.c.l.s4 1983009808
        %v897 = vunpack.c.0.s8 %v896
        %v898 = vlaneseq
        %v899 = vshrl.u32 %v898, 7
        %v900 = vsub.s32 %v897, %v899
        %v901 = vrot.slane %v887, %v900
        %v902 = vcombine.low %v878, %v894
        %v903 = vcombine.high %v878, %v894
        %v905 = vunpack.c.l.s4 1934713408
        %v906 = vunpack.c.0.s8 %v905
        %v907 = vlaneseq
        %v908 = vshrl.u32 %v907, 7
        %v909 = vsub.s32 %v906, %v908
        %v910 = vrot.slane %v902, %v909
        %v912 = vunpack.c.l.s4 1934713408
        %v913 = vunpack.c.0.s8 %v912
        %v914 = vlaneseq
        %v915 = vshrl.u32 %v914, 7
        %v916 = vsub.s32 %v913, %v915
        %v917 = vrot.slane %v903, %v916
        %v918 = vcombine.low %v885, %v901
        %v919 = vcombine.high %v885, %v901
        %v921 = vunpack.c.l.s4 1934713408
        %v922 = vunpack.c.0.s8 %v921
        %v923 = vlaneseq
        %v924 = vshrl.u32 %v923, 7
        %v925 = vsub.s32 %v922, %v924
        %v926 = vrot.slane %v918, %v925
        %v928 = vunpack.c.l.s4 1934713408
        %v929 = vunpack.c.0.s8 %v928
        %v930 = vlaneseq
        %v931 = vshrl.u32 %v930, 7
        %v932 = vsub.s32 %v929, %v931
        %v933 = vrot.slane %v919, %v932
        %v934 = vcombine.high %v910, 0.0
        %v935 = vcombine.high %v917, 0.0
        %v936 = vcombine.high %v926, 0.0
        %v937 = vcombine.high %v933, 0.0
        %v938 = vcombine.low %v910, %v917
        %v940 = vunpack.c.l.s4 1983009808
        %v941 = vunpack.c.0.s8 %v940
        %v942 = vlaneseq
        %v943 = vshrl.u32 %v942, 7
        %v944 = vsub.s32 %v941, %v943
        %v945 = vrot.slane %v938, %v944
        %v946 = vcombine.low %v934, %v935
        %v948 = vunpack.c.l.s4 1983009808
        %v949 = vunpack.c.0.s8 %v948
        %v950 = vlaneseq
        %v951 = vshrl.u32 %v950, 7
        %v952 = vsub.s32 %v949, %v951
        %v953 = vrot.slane %v946, %v952
        %v954 = vcombine.low %v926, %v933
        %v956 = vunpack.c.l.s4 1983009808
        %v957 = vunpack.c.0.s8 %v956
        %v958 = vlaneseq
        %v959 = vshrl.u32 %v958, 7
        %v960 = vsub.s32 %v957, %v959
        %v961 = vrot.slane %v954, %v960
        %v962 = vcombine.low %v936, %v937
        %v964 = vunpack.c.l.s4 1983009808
        %v965 = vunpack.c.0.s8 %v964
        %v966 = vlaneseq
        %v967 = vshrl.u32 %v966, 7
        %v968 = vsub.s32 %v965, %v967
        %v969 = vrot.slane %v962, %v968
        %v970 = vcombine.low %v945, %v953
        %v971 = vcombine.high %v945, %v953
        %v973 = vunpack.c.l.s4 1934713408
        %v974 = vunpack.c.0.s8 %v973
        %v975 = vlaneseq
        %v976 = vshrl.u32 %v975, 7
        %v977 = vsub.s32 %v974, %v976
        %v978 = vrot.slane %v970, %v977
        %v980 = vunpack.c.l.s4 1934713408
        %v981 = vunpack.c.0.s8 %v980
        %v982 = vlaneseq
        %v983 = vshrl.u32 %v982, 7
        %v984 = vsub.s32 %v981, %v983
        %v985 = vrot.slane %v971, %v984
        %v986 = vcombine.low %v961, %v969
        %v987 = vcombine.high %v961, %v969
        %v989 = vunpack.c.l.s4 1934713408
        %v990 = vunpack.c.0.s8 %v989
        %v991 = vlaneseq
        %v992 = vshrl.u32 %v991, 7
        %v993 = vsub.s32 %v990, %v992
        %v994 = vrot.slane %v986, %v993
        %v996 = vunpack.c.l.s4 1934713408
        %v997 = vunpack.c.0.s8 %v996
        %v998 = vlaneseq
        %v999 = vshrl.u32 %v998, 7
        %v1000 = vsub.s32 %v997, %v999
        %v1001 = vrot.slane %v987, %v1000
        %v1002 = vcombine.low %v978, %v994
        %v1003 = vcombine.high %v978, %v994
        %v1004 = vcombine.low %v985, %v1001
        %v1005 = vcombine.high %v985, %v1001
        %v1006 = vpack.c.bf16 %v1002, %v1002
        %v1007 = vpack.c.bf16 %v1003, %v1003
        %v1008 = vpack.c.bf16 %v1004, %v1004
        %v1009 = vpack.c.bf16 %v1005, %v1005
        %1011 = vrot.lane.b32.xlu0 %v855, 120
        %v1012 = vpop.permute.xlu0 %1011
        %1014 = vrot.lane.b32.xlu0 %v855, 112
        %v1015 = vpop.permute.xlu0 %1014
        %1017 = vrot.lane.b32.xlu0 %v855, 104
        %v1018 = vpop.permute.xlu0 %1017
        %v1020 = vcombine.low %v855, %v1015
        %v1021 = vcombine.high %v855, %v1015
        %v1023 = vunpack.c.l.s4 1983009808
        %v1024 = vunpack.c.0.s8 %v1023
        %v1025 = vlaneseq
        %v1026 = vshrl.u32 %v1025, 7
        %v1027 = vsub.s32 %v1024, %v1026
        %v1028 = vrot.slane %v1020, %v1027
        %v1030 = vunpack.c.l.s4 1983009808
        %v1031 = vunpack.c.0.s8 %v1030
        %v1032 = vlaneseq
        %v1033 = vshrl.u32 %v1032, 7
        %v1034 = vsub.s32 %v1031, %v1033
        %v1035 = vrot.slane %v1021, %v1034
        %v1036 = vcombine.low %v1012, %v1018
        %v1037 = vcombine.high %v1012, %v1018
        %v1039 = vunpack.c.l.s4 1983009808
        %v1040 = vunpack.c.0.s8 %v1039
        %v1041 = vlaneseq
        %v1042 = vshrl.u32 %v1041, 7
        %v1043 = vsub.s32 %v1040, %v1042
        %v1044 = vrot.slane %v1036, %v1043
        %v1046 = vunpack.c.l.s4 1983009808
        %v1047 = vunpack.c.0.s8 %v1046
        %v1048 = vlaneseq
        %v1049 = vshrl.u32 %v1048, 7
        %v1050 = vsub.s32 %v1047, %v1049
        %v1051 = vrot.slane %v1037, %v1050
        %v1052 = vcombine.low %v1028, %v1044
        %v1053 = vcombine.high %v1028, %v1044
        %v1055 = vunpack.c.l.s4 1934713408
        %v1056 = vunpack.c.0.s8 %v1055
        %v1057 = vlaneseq
        %v1058 = vshrl.u32 %v1057, 7
        %v1059 = vsub.s32 %v1056, %v1058
        %v1060 = vrot.slane %v1052, %v1059
        %v1062 = vunpack.c.l.s4 1934713408
        %v1063 = vunpack.c.0.s8 %v1062
        %v1064 = vlaneseq
        %v1065 = vshrl.u32 %v1064, 7
        %v1066 = vsub.s32 %v1063, %v1065
        %v1067 = vrot.slane %v1053, %v1066
        %v1068 = vcombine.low %v1035, %v1051
        %v1069 = vcombine.high %v1035, %v1051
        %v1071 = vunpack.c.l.s4 1934713408
        %v1072 = vunpack.c.0.s8 %v1071
        %v1073 = vlaneseq
        %v1074 = vshrl.u32 %v1073, 7
        %v1075 = vsub.s32 %v1072, %v1074
        %v1076 = vrot.slane %v1068, %v1075
        %v1078 = vunpack.c.l.s4 1934713408
        %v1079 = vunpack.c.0.s8 %v1078
        %v1080 = vlaneseq
        %v1081 = vshrl.u32 %v1080, 7
        %v1082 = vsub.s32 %v1079, %v1081
        %v1083 = vrot.slane %v1069, %v1082
        %v1084 = vcombine.high %v1060, 0.0
        %v1085 = vcombine.high %v1067, 0.0
        %v1086 = vcombine.high %v1076, 0.0
        %v1087 = vcombine.high %v1083, 0.0
        %v1088 = vcombine.low %v1060, %v1067
        %v1090 = vunpack.c.l.s4 1983009808
        %v1091 = vunpack.c.0.s8 %v1090
        %v1092 = vlaneseq
        %v1093 = vshrl.u32 %v1092, 7
        %v1094 = vsub.s32 %v1091, %v1093
        %v1095 = vrot.slane %v1088, %v1094
        %v1096 = vcombine.low %v1084, %v1085
        %v1098 = vunpack.c.l.s4 1983009808
        %v1099 = vunpack.c.0.s8 %v1098
        %v1100 = vlaneseq
        %v1101 = vshrl.u32 %v1100, 7
        %v1102 = vsub.s32 %v1099, %v1101
        %v1103 = vrot.slane %v1096, %v1102
        %v1104 = vcombine.low %v1076, %v1083
        %v1106 = vunpack.c.l.s4 1983009808
        %v1107 = vunpack.c.0.s8 %v1106
        %v1108 = vlaneseq
        %v1109 = vshrl.u32 %v1108, 7
        %v1110 = vsub.s32 %v1107, %v1109
        %v1111 = vrot.slane %v1104, %v1110
        %v1112 = vcombine.low %v1086, %v1087
        %v1114 = vunpack.c.l.s4 1983009808
        %v1115 = vunpack.c.0.s8 %v1114
        %v1116 = vlaneseq
        %v1117 = vshrl.u32 %v1116, 7
        %v1118 = vsub.s32 %v1115, %v1117
        %v1119 = vrot.slane %v1112, %v1118
        %v1120 = vcombine.low %v1095, %v1103
        %v1121 = vcombine.high %v1095, %v1103
        %v1123 = vunpack.c.l.s4 1934713408
        %v1124 = vunpack.c.0.s8 %v1123
        %v1125 = vlaneseq
        %v1126 = vshrl.u32 %v1125, 7
        %v1127 = vsub.s32 %v1124, %v1126
        %v1128 = vrot.slane %v1120, %v1127
        %v1130 = vunpack.c.l.s4 1934713408
        %v1131 = vunpack.c.0.s8 %v1130
        %v1132 = vlaneseq
        %v1133 = vshrl.u32 %v1132, 7
        %v1134 = vsub.s32 %v1131, %v1133
        %v1135 = vrot.slane %v1121, %v1134
        %v1136 = vcombine.low %v1111, %v1119
        %v1137 = vcombine.high %v1111, %v1119
        %v1139 = vunpack.c.l.s4 1934713408
        %v1140 = vunpack.c.0.s8 %v1139
        %v1141 = vlaneseq
        %v1142 = vshrl.u32 %v1141, 7
        %v1143 = vsub.s32 %v1140, %v1142
        %v1144 = vrot.slane %v1136, %v1143
        %v1146 = vunpack.c.l.s4 1934713408
        %v1147 = vunpack.c.0.s8 %v1146
        %v1148 = vlaneseq
        %v1149 = vshrl.u32 %v1148, 7
        %v1150 = vsub.s32 %v1147, %v1149
        %v1151 = vrot.slane %v1137, %v1150
        %v1152 = vcombine.low %v1128, %v1144
        %v1153 = vcombine.high %v1128, %v1144
        %v1154 = vcombine.low %v1135, %v1151
        %v1155 = vcombine.high %v1135, %v1151
        %v1156 = vpack.c.bf16 %v1152, %v1152
        %v1157 = vpack.c.bf16 %v1153, %v1153
        %v1158 = vpack.c.bf16 %v1154, %v1154
        %v1159 = vpack.c.bf16 %v1155, %v1155
        %v1160 = vld [vmem:[#allocation2] sm:$0xf]
        %v1161 = vld [vmem:[#allocation2 + $0x4] sm:$0xf]
        %v1162 = vld [vmem:[#allocation2 + $0x8] sm:$0xf]
        %v1163 = vld [vmem:[#allocation2 + $0xc] sm:$0xf]
        %v1164 = vld [vmem:[%s478] sm:$0xff]
        %vm1165 = vcmask 64512
        %v1167 = vsel %vm1165, %v1160, 0
        %v1170 = vsel %vm1165, %v1006, 0
        %1172 = vmatprep.subr.bf16.mxu0 0
        %1173 = vmatpush1.bf16.xpose.msra.mxu0 %v1170
        %1174 = vmatprep.subr.bf16.mxu0 0
        %1175 = vmatpush1.bf16.xpose.msra.mxu0 0
        %1176 = vmatprep.subr.bf16.mxu0 0
        %1177 = vmatpush1.bf16.xpose.msra.mxu0 0
        %1178 = vmatprep.subr.bf16.mxu0 0
        %1179 = vmatpush1.bf16.xpose.msra.mxu0 0
        %1180 = vmatprep.subr.bf16.mxu0 0
        %1181 = vmatpush1.bf16.xpose.msra.mxu0 0
        %1182 = vmatprep.subr.bf16.mxu0 0
        %1183 = vmatpush1.bf16.xpose.msra.mxu0 0
        %1184 = vmatprep.subr.bf16.mxu0 0
        %1185 = vmatpush1.bf16.xpose.msra.mxu0 0
        %1186 = vmatprep.subr.bf16.mxu0 0
        %1187 = vmatpush1.bf16.xpose.msra.mxu0 0
        %1188 = vmatprep.subr.bf16.mxu0 0
        %1189 = vmatpush1.bf16.xpose.msra.mxu0 0
        %1190 = vmatprep.subr.bf16.mxu0 0
        %1191 = vmatpush1.bf16.xpose.msra.mxu0 0
        %1192 = vmatprep.subr.bf16.mxu0 0
        %1193 = vmatpush1.bf16.xpose.msra.mxu0 0
        %1194 = vmatprep.subr.bf16.mxu0 0
        %1195 = vmatpush1.bf16.xpose.msra.mxu0 0
        %1196 = vmatprep.subr.bf16.mxu0 0
        %1197 = vmatpush1.bf16.xpose.msra.mxu0 0
        %1198 = vmatprep.subr.bf16.mxu0 0
        %1199 = vmatpush1.bf16.xpose.msra.mxu0 0
        %1200 = vmatprep.subr.bf16.mxu0 0
        %1201 = vmatpush1.bf16.xpose.msra.mxu0 0
        %1202 = vmatprep.subr.bf16.mxu0 0
        %1203 = vmatpush1.bf16.xpose.msra.mxu0 0
        %1204 = vmatprep.mubr.bf16.mxu0 0
        %1205 = vmatmul.mubr.bf16.gmra.mrb[0].mxu0 %v1167
        %v1206 = vpop.f32.mrb[0].mxu0
        %v1207 = vadd.f32 %v1164, %v1206
        %v1208 = vpop.f32.mrb[0].mxu0
        %v1209 = vpop.f32.mrb[0].mxu0
        %v1210 = vpop.f32.mrb[0].mxu0
        %1211 = vdwg.mxu0
        %v1213 = vsel %vm1165, %v1161, 0
        %v1216 = vsel %vm1165, %v1007, 0
        %1218 = vmatprep.subr.bf16.mxu0 0
        %1219 = vmatpush1.bf16.xpose.msra.mxu0 %v1216
        %1220 = vmatprep.subr.bf16.mxu0 0
        %1221 = vmatpush1.bf16.xpose.msra.mxu0 0
        %1222 = vmatprep.subr.bf16.mxu0 0
        %1223 = vmatpush1.bf16.xpose.msra.mxu0 0
        %1224 = vmatprep.subr.bf16.mxu0 0
        %1225 = vmatpush1.bf16.xpose.msra.mxu0 0
        %1226 = vmatprep.subr.bf16.mxu0 0
        %1227 = vmatpush1.bf16.xpose.msra.mxu0 0
        %1228 = vmatprep.subr.bf16.mxu0 0
        %1229 = vmatpush1.bf16.xpose.msra.mxu0 0
        %1230 = vmatprep.subr.bf16.mxu0 0
        %1231 = vmatpush1.bf16.xpose.msra.mxu0 0
        %1232 = vmatprep.subr.bf16.mxu0 0
        %1233 = vmatpush1.bf16.xpose.msra.mxu0 0
        %1234 = vmatprep.subr.bf16.mxu0 0
        %1235 = vmatpush1.bf16.xpose.msra.mxu0 0
        %1236 = vmatprep.subr.bf16.mxu0 0
        %1237 = vmatpush1.bf16.xpose.msra.mxu0 0
        %1238 = vmatprep.subr.bf16.mxu0 0
        %1239 = vmatpush1.bf16.xpose.msra.mxu0 0
        %1240 = vmatprep.subr.bf16.mxu0 0
        %1241 = vmatpush1.bf16.xpose.msra.mxu0 0
        %1242 = vmatprep.subr.bf16.mxu0 0
        %1243 = vmatpush1.bf16.xpose.msra.mxu0 0
        %1244 = vmatprep.subr.bf16.mxu0 0
        %1245 = vmatpush1.bf16.xpose.msra.mxu0 0
        %1246 = vmatprep.subr.bf16.mxu0 0
        %1247 = vmatpush1.bf16.xpose.msra.mxu0 0
        %1248 = vmatprep.subr.bf16.mxu0 0
        %1249 = vmatpush1.bf16.xpose.msra.mxu0 0
        %1250 = vmatprep.mubr.bf16.mxu0 0
        %1251 = vmatmul.mubr.bf16.gmra.mrb[0].mxu0 %v1213
        %v1252 = vpop.f32.mrb[0].mxu0
        %v1253 = vadd.f32 %v1164, %v1252
        %v1254 = vpop.f32.mrb[0].mxu0
        %v1255 = vpop.f32.mrb[0].mxu0
        %v1256 = vpop.f32.mrb[0].mxu0
        %1257 = vdwg.mxu0
        %v1259 = vsel %vm1165, %v1162, 0
        %v1262 = vsel %vm1165, %v1008, 0
        %1264 = vmatprep.subr.bf16.mxu0 0
        %1265 = vmatpush1.bf16.xpose.msra.mxu0 %v1262
        %1266 = vmatprep.subr.bf16.mxu0 0
        %1267 = vmatpush1.bf16.xpose.msra.mxu0 0
        %1268 = vmatprep.subr.bf16.mxu0 0
        %1269 = vmatpush1.bf16.xpose.msra.mxu0 0
        %1270 = vmatprep.subr.bf16.mxu0 0
        %1271 = vmatpush1.bf16.xpose.msra.mxu0 0
        %1272 = vmatprep.subr.bf16.mxu0 0
        %1273 = vmatpush1.bf16.xpose.msra.mxu0 0
        %1274 = vmatprep.subr.bf16.mxu0 0
        %1275 = vmatpush1.bf16.xpose.msra.mxu0 0
        %1276 = vmatprep.subr.bf16.mxu0 0
        %1277 = vmatpush1.bf16.xpose.msra.mxu0 0
        %1278 = vmatprep.subr.bf16.mxu0 0
        %1279 = vmatpush1.bf16.xpose.msra.mxu0 0
        %1280 = vmatprep.subr.bf16.mxu0 0
        %1281 = vmatpush1.bf16.xpose.msra.mxu0 0
        %1282 = vmatprep.subr.bf16.mxu0 0
        %1283 = vmatpush1.bf16.xpose.msra.mxu0 0
        %1284 = vmatprep.subr.bf16.mxu0 0
        %1285 = vmatpush1.bf16.xpose.msra.mxu0 0
        %1286 = vmatprep.subr.bf16.mxu0 0
        %1287 = vmatpush1.bf16.xpose.msra.mxu0 0
        %1288 = vmatprep.subr.bf16.mxu0 0
        %1289 = vmatpush1.bf16.xpose.msra.mxu0 0
        %1290 = vmatprep.subr.bf16.mxu0 0
        %1291 = vmatpush1.bf16.xpose.msra.mxu0 0
        %1292 = vmatprep.subr.bf16.mxu0 0
        %1293 = vmatpush1.bf16.xpose.msra.mxu0 0
        %1294 = vmatprep.subr.bf16.mxu0 0
        %1295 = vmatpush1.bf16.xpose.msra.mxu0 0
        %1296 = vmatprep.mubr.bf16.mxu0 0
        %1297 = vmatmul.mubr.bf16.gmra.mrb[0].mxu0 %v1259
        %v1298 = vpop.f32.mrb[0].mxu0
        %v1299 = vadd.f32 %v1164, %v1298
        %v1300 = vpop.f32.mrb[0].mxu0
        %v1301 = vpop.f32.mrb[0].mxu0
        %v1302 = vpop.f32.mrb[0].mxu0
        %1303 = vdwg.mxu0
        %v1305 = vsel %vm1165, %v1163, 0
        %v1308 = vsel %vm1165, %v1009, 0
        %1310 = vmatprep.subr.bf16.mxu0 0
        %1311 = vmatpush1.bf16.xpose.msra.mxu0 %v1308
        %1312 = vmatprep.subr.bf16.mxu0 0
        %1313 = vmatpush1.bf16.xpose.msra.mxu0 0
        %1314 = vmatprep.subr.bf16.mxu0 0
        %1315 = vmatpush1.bf16.xpose.msra.mxu0 0
        %1316 = vmatprep.subr.bf16.mxu0 0
        %1317 = vmatpush1.bf16.xpose.msra.mxu0 0
        %1318 = vmatprep.subr.bf16.mxu0 0
        %1319 = vmatpush1.bf16.xpose.msra.mxu0 0
        %1320 = vmatprep.subr.bf16.mxu0 0
        %1321 = vmatpush1.bf16.xpose.msra.mxu0 0
        %1322 = vmatprep.subr.bf16.mxu0 0
        %1323 = vmatpush1.bf16.xpose.msra.mxu0 0
        %1324 = vmatprep.subr.bf16.mxu0 0
        %1325 = vmatpush1.bf16.xpose.msra.mxu0 0
        %1326 = vmatprep.subr.bf16.mxu0 0
        %1327 = vmatpush1.bf16.xpose.msra.mxu0 0
        %1328 = vmatprep.subr.bf16.mxu0 0
        %1329 = vmatpush1.bf16.xpose.msra.mxu0 0
        %1330 = vmatprep.subr.bf16.mxu0 0
        %1331 = vmatpush1.bf16.xpose.msra.mxu0 0
        %1332 = vmatprep.subr.bf16.mxu0 0
        %1333 = vmatpush1.bf16.xpose.msra.mxu0 0
        %1334 = vmatprep.subr.bf16.mxu0 0
        %1335 = vmatpush1.bf16.xpose.msra.mxu0 0
        %1336 = vmatprep.subr.bf16.mxu0 0
        %1337 = vmatpush1.bf16.xpose.msra.mxu0 0
        %1338 = vmatprep.subr.bf16.mxu0 0
        %1339 = vmatpush1.bf16.xpose.msra.mxu0 0
        %1340 = vmatprep.subr.bf16.mxu0 0
        %1341 = vmatpush1.bf16.xpose.msra.mxu0 0
        %1342 = vmatprep.mubr.bf16.mxu0 0
        %1343 = vmatmul.mubr.bf16.gmra.mrb[0].mxu0 %v1305
        %v1344 = vpop.f32.mrb[0].mxu0
        %v1345 = vadd.f32 %v1164, %v1344
        %v1346 = vpop.f32.mrb[0].mxu0
        %v1347 = vpop.f32.mrb[0].mxu0
        %v1348 = vpop.f32.mrb[0].mxu0
        %1349 = vdwg.mxu0
        %v1350 = vld [vmem:[#allocation3] sm:$0xff]
        %v1351 = vld [vmem:[#allocation3 + $0x8] sm:$0xff]
        %v1352 = vld [vmem:[#allocation3 + $0x10] sm:$0xff]
        %v1353 = vld [vmem:[#allocation3 + $0x18] sm:$0xff]
        %v1354 = vsel %vm1165, %v1207, -inf
        %1355 = vmax.xlane.f32.xlu0 %v1354
        %v1356 = vpop.xlane.xlu0 %1355
        %v1357 = vsel %vm1165, %v1253, -inf
        %1358 = vmax.xlane.f32.xlu0 %v1357
        %v1359 = vpop.xlane.xlu0 %1358
        %v1360 = vsel %vm1165, %v1299, -inf
        %1361 = vmax.xlane.f32.xlu0 %v1360
        %v1362 = vpop.xlane.xlu0 %1361
        %v1363 = vsel %vm1165, %v1345, -inf
        %1364 = vmax.xlane.f32.xlu0 %v1363
        %v1365 = vpop.xlane.xlu0 %1364
        %v1366 = vmax.f32 %v1350, %v1356
        %v1367 = vmax.f32 %v1351, %v1359
        %v1368 = vmax.f32 %v1352, %v1362
        %v1369 = vmax.f32 %v1353, %v1365
        %v1370 = vsub.f32 %v1350, %v1366
        %v1371 = vsub.f32 %v1351, %v1367
        %v1372 = vsub.f32 %v1352, %v1368
        %v1373 = vsub.f32 %v1353, %v1369
        %v1374 = vmul.f32 %v1370, 1.442695
        %v1375 = vpow.pop %v1374
        %v1376 = vmul.f32 %v1371, 1.442695
        %v1377 = vpow.pop %v1376
        %v1378 = vmul.f32 %v1372, 1.442695
        %v1379 = vpow.pop %v1378
        %v1380 = vmul.f32 %v1373, 1.442695
        %v1381 = vpow.pop %v1380
        %1383 = vset.pattern.permute.xlu0 0
        %1384 = vperm.xlu0 %1383, %v1366
        %v1385 = vpop.permute.xlu0 %1384
        %1388 = vset.pattern.permute.xlu0 0
        %1389 = vperm.xlu0 %1388, %v1367
        %v1390 = vpop.permute.xlu0 %1389
        %1393 = vset.pattern.permute.xlu0 0
        %1394 = vperm.xlu0 %1393, %v1368
        %v1395 = vpop.permute.xlu0 %1394
        %1398 = vset.pattern.permute.xlu0 0
        %1399 = vperm.xlu0 %1398, %v1369
        %v1400 = vpop.permute.xlu0 %1399
        %v1402 = vsub.f32 %v1207, %v1385
        %v1403 = vsub.f32 %v1253, %v1390
        %v1404 = vsub.f32 %v1299, %v1395
        %v1405 = vsub.f32 %v1345, %v1400
        %v1406 = vmul.f32 %v1402, 1.442695
        %v1407 = vpow.pop %v1406
        %v1408 = vmul.f32 %v1403, 1.442695
        %v1409 = vpow.pop %v1408
        %v1410 = vmul.f32 %v1404, 1.442695
        %v1411 = vpow.pop %v1410
        %v1412 = vmul.f32 %v1405, 1.442695
        %v1413 = vpow.pop %v1412
        %v1414 = vld [vmem:[#allocation4] sm:$0xff]
        %v1415 = vld [vmem:[#allocation4 + $0x8] sm:$0xff]
        %v1416 = vld [vmem:[#allocation4 + $0x10] sm:$0xff]
        %v1417 = vld [vmem:[#allocation4 + $0x18] sm:$0xff]
        %v1418 = vmul.f32 %v1375, %v1414
        %v1419 = vmul.f32 %v1377, %v1415
        %v1420 = vmul.f32 %v1379, %v1416
        %v1421 = vmul.f32 %v1381, %v1417
        %v1422 = vsel %vm1165, %v1407, 0.0
        %1423 = vadd.xlane.f32.xlu0 %v1422
        %v1424 = vpop.xlane.xlu0 %1423
        %v1425 = vsel %vm1165, %v1409, 0.0
        %1426 = vadd.xlane.f32.xlu0 %v1425
        %v1427 = vpop.xlane.xlu0 %1426
        %v1428 = vsel %vm1165, %v1411, 0.0
        %1429 = vadd.xlane.f32.xlu0 %v1428
        %v1430 = vpop.xlane.xlu0 %1429
        %v1431 = vsel %vm1165, %v1413, 0.0
        %1432 = vadd.xlane.f32.xlu0 %v1431
        %v1433 = vpop.xlane.xlu0 %1432
        %v1434 = vadd.f32 %v1418, %v1424
        %v1435 = vadd.f32 %v1419, %v1427
        %v1436 = vadd.f32 %v1420, %v1430
        %v1437 = vadd.f32 %v1421, %v1433
        %vm1438 = vcmask 7168
        %1439 = vst.msk [vmem:[#allocation4] sm:$0xff] %vm1438, %v1434
        %1440 = vst.msk [vmem:[#allocation4 + $0x8] sm:$0xff] %vm1438, %v1435
        %1441 = vst.msk [vmem:[#allocation4 + $0x10] sm:$0xff] %vm1438, %v1436
        %1442 = vst.msk [vmem:[#allocation4 + $0x18] sm:$0xff] %vm1438, %v1437
        %v1443 = vld [vmem:[#allocation5] sm:$0xff]
        %v1444 = vld [vmem:[#allocation5 + $0x8] sm:$0xff]
        %v1445 = vld [vmem:[#allocation5 + $0x10] sm:$0xff]
        %v1446 = vld [vmem:[#allocation5 + $0x18] sm:$0xff]
        %1448 = vset.pattern.permute.xlu0 0
        %1449 = vperm.xlu0 %1448, %v1375
        %v1450 = vpop.permute.xlu0 %1449
        %1453 = vset.pattern.permute.xlu0 0
        %1454 = vperm.xlu0 %1453, %v1377
        %v1455 = vpop.permute.xlu0 %1454
        %1458 = vset.pattern.permute.xlu0 0
        %1459 = vperm.xlu0 %1458, %v1379
        %v1460 = vpop.permute.xlu0 %1459
        %1463 = vset.pattern.permute.xlu0 0
        %1464 = vperm.xlu0 %1463, %v1381
        %v1465 = vpop.permute.xlu0 %1464
        %v1467 = vmul.f32 %v1450, %v1443
        %v1468 = vmul.f32 %v1455, %v1444
        %v1469 = vmul.f32 %v1460, %v1445
        %v1470 = vmul.f32 %v1465, %v1446
        %v1471 = vpack.c.bf16 %v1407, %v1407
        %v1472 = vpack.c.bf16 %v1409, %v1409
        %v1473 = vpack.c.bf16 %v1411, %v1411
        %v1474 = vpack.c.bf16 %v1413, %v1413
        %v1476 = vsel %vm1165, %v1471, 0
        %vm1478 = vcmask 1043456
        %v1480 = vsel %vm1478, %v1156, 0
        %1482 = vmatprep.subr.bf16.mxu0 0
        %1483 = vmatpush1.bf16.msra.mxu0 %v1480
        %1484 = vmatprep.subr.bf16.mxu0 0
        %1485 = vmatpush1.bf16.msra.mxu0 0
        %1486 = vmatprep.subr.bf16.mxu0 0
        %1487 = vmatpush1.bf16.msra.mxu0 0
        %1488 = vmatprep.subr.bf16.mxu0 0
        %1489 = vmatpush1.bf16.msra.mxu0 0
        %1490 = vmatprep.subr.bf16.mxu0 0
        %1491 = vmatpush1.bf16.msra.mxu0 0
        %1492 = vmatprep.subr.bf16.mxu0 0
        %1493 = vmatpush1.bf16.msra.mxu0 0
        %1494 = vmatprep.subr.bf16.mxu0 0
        %1495 = vmatpush1.bf16.msra.mxu0 0
        %1496 = vmatprep.subr.bf16.mxu0 0
        %1497 = vmatpush1.bf16.msra.mxu0 0
        %1498 = vmatprep.subr.bf16.mxu0 0
        %1499 = vmatpush1.bf16.msra.mxu0 0
        %1500 = vmatprep.subr.bf16.mxu0 0
        %1501 = vmatpush1.bf16.msra.mxu0 0
        %1502 = vmatprep.subr.bf16.mxu0 0
        %1503 = vmatpush1.bf16.msra.mxu0 0
        %1504 = vmatprep.subr.bf16.mxu0 0
        %1505 = vmatpush1.bf16.msra.mxu0 0
        %1506 = vmatprep.subr.bf16.mxu0 0
        %1507 = vmatpush1.bf16.msra.mxu0 0
        %1508 = vmatprep.subr.bf16.mxu0 0
        %1509 = vmatpush1.bf16.msra.mxu0 0
        %1510 = vmatprep.subr.bf16.mxu0 0
        %1511 = vmatpush1.bf16.msra.mxu0 0
        %1512 = vmatprep.subr.bf16.mxu0 0
        %1513 = vmatpush1.bf16.msra.mxu0 0
        %1514 = vmatprep.mubr.bf16.mxu0 0
        %1515 = vmatmul.mubr.bf16.gmra.mrb[0].mxu0 %v1476
        %v1516 = vpop.f32.mrb[0].mxu0
        %v1517 = vadd.f32 0.0, %v1516
        %v1518 = vpop.f32.mrb[0].mxu0
        %v1519 = vpop.f32.mrb[0].mxu0
        %v1520 = vpop.f32.mrb[0].mxu0
        %1521 = vdwg.mxu0
        %v1523 = vsel %vm1165, %v1472, 0
        %v1526 = vsel %vm1478, %v1157, 0
        %1528 = vmatprep.subr.bf16.mxu0 0
        %1529 = vmatpush1.bf16.msra.mxu0 %v1526
        %1530 = vmatprep.subr.bf16.mxu0 0
        %1531 = vmatpush1.bf16.msra.mxu0 0
        %1532 = vmatprep.subr.bf16.mxu0 0
        %1533 = vmatpush1.bf16.msra.mxu0 0
        %1534 = vmatprep.subr.bf16.mxu0 0
        %1535 = vmatpush1.bf16.msra.mxu0 0
        %1536 = vmatprep.subr.bf16.mxu0 0
        %1537 = vmatpush1.bf16.msra.mxu0 0
        %1538 = vmatprep.subr.bf16.mxu0 0
        %1539 = vmatpush1.bf16.msra.mxu0 0
        %1540 = vmatprep.subr.bf16.mxu0 0
        %1541 = vmatpush1.bf16.msra.mxu0 0
        %1542 = vmatprep.subr.bf16.mxu0 0
        %1543 = vmatpush1.bf16.msra.mxu0 0
        %1544 = vmatprep.subr.bf16.mxu0 0
        %1545 = vmatpush1.bf16.msra.mxu0 0
        %1546 = vmatprep.subr.bf16.mxu0 0
        %1547 = vmatpush1.bf16.msra.mxu0 0
        %1548 = vmatprep.subr.bf16.mxu0 0
        %1549 = vmatpush1.bf16.msra.mxu0 0
        %1550 = vmatprep.subr.bf16.mxu0 0
        %1551 = vmatpush1.bf16.msra.mxu0 0
        %1552 = vmatprep.subr.bf16.mxu0 0
        %1553 = vmatpush1.bf16.msra.mxu0 0
        %1554 = vmatprep.subr.bf16.mxu0 0
        %1555 = vmatpush1.bf16.msra.mxu0 0
        %1556 = vmatprep.subr.bf16.mxu0 0
        %1557 = vmatpush1.bf16.msra.mxu0 0
        %1558 = vmatprep.subr.bf16.mxu0 0
        %1559 = vmatpush1.bf16.msra.mxu0 0
        %1560 = vmatprep.mubr.bf16.mxu0 0
        %1561 = vmatmul.mubr.bf16.gmra.mrb[0].mxu0 %v1523
        %v1562 = vpop.f32.mrb[0].mxu0
        %v1563 = vadd.f32 0.0, %v1562
        %v1564 = vpop.f32.mrb[0].mxu0
        %v1565 = vpop.f32.mrb[0].mxu0
        %v1566 = vpop.f32.mrb[0].mxu0
        %1567 = vdwg.mxu0
        %v1569 = vsel %vm1165, %v1473, 0
        %v1572 = vsel %vm1478, %v1158, 0
        %1574 = vmatprep.subr.bf16.mxu0 0
        %1575 = vmatpush1.bf16.msra.mxu0 %v1572
        %1576 = vmatprep.subr.bf16.mxu0 0
        %1577 = vmatpush1.bf16.msra.mxu0 0
        %1578 = vmatprep.subr.bf16.mxu0 0
        %1579 = vmatpush1.bf16.msra.mxu0 0
        %1580 = vmatprep.subr.bf16.mxu0 0
        %1581 = vmatpush1.bf16.msra.mxu0 0
        %1582 = vmatprep.subr.bf16.mxu0 0
        %1583 = vmatpush1.bf16.msra.mxu0 0
        %1584 = vmatprep.subr.bf16.mxu0 0
        %1585 = vmatpush1.bf16.msra.mxu0 0
        %1586 = vmatprep.subr.bf16.mxu0 0
        %1587 = vmatpush1.bf16.msra.mxu0 0
        %1588 = vmatprep.subr.bf16.mxu0 0
        %1589 = vmatpush1.bf16.msra.mxu0 0
        %1590 = vmatprep.subr.bf16.mxu0 0
        %1591 = vmatpush1.bf16.msra.mxu0 0
        %1592 = vmatprep.subr.bf16.mxu0 0
        %1593 = vmatpush1.bf16.msra.mxu0 0
        %1594 = vmatprep.subr.bf16.mxu0 0
        %1595 = vmatpush1.bf16.msra.mxu0 0
        %1596 = vmatprep.subr.bf16.mxu0 0
        %1597 = vmatpush1.bf16.msra.mxu0 0
        %1598 = vmatprep.subr.bf16.mxu0 0
        %1599 = vmatpush1.bf16.msra.mxu0 0
        %1600 = vmatprep.subr.bf16.mxu0 0
        %1601 = vmatpush1.bf16.msra.mxu0 0
        %1602 = vmatprep.subr.bf16.mxu0 0
        %1603 = vmatpush1.bf16.msra.mxu0 0
        %1604 = vmatprep.subr.bf16.mxu0 0
        %1605 = vmatpush1.bf16.msra.mxu0 0
        %1606 = vmatprep.mubr.bf16.mxu0 0
        %1607 = vmatmul.mubr.bf16.gmra.mrb[0].mxu0 %v1569
        %v1608 = vpop.f32.mrb[0].mxu0
        %v1609 = vadd.f32 0.0, %v1608
        %v1610 = vpop.f32.mrb[0].mxu0
        %v1611 = vpop.f32.mrb[0].mxu0
        %v1612 = vpop.f32.mrb[0].mxu0
        %1613 = vdwg.mxu0
        %v1615 = vsel %vm1165, %v1474, 0
        %v1618 = vsel %vm1478, %v1159, 0
        %1620 = vmatprep.subr.bf16.mxu0 0
        %1621 = vmatpush1.bf16.msra.mxu0 %v1618
        %1622 = vmatprep.subr.bf16.mxu0 0
        %1623 = vmatpush1.bf16.msra.mxu0 0
        %1624 = vmatprep.subr.bf16.mxu0 0
        %1625 = vmatpush1.bf16.msra.mxu0 0
        %1626 = vmatprep.subr.bf16.mxu0 0
        %1627 = vmatpush1.bf16.msra.mxu0 0
        %1628 = vmatprep.subr.bf16.mxu0 0
        %1629 = vmatpush1.bf16.msra.mxu0 0
        %1630 = vmatprep.subr.bf16.mxu0 0
        %1631 = vmatpush1.bf16.msra.mxu0 0
        %1632 = vmatprep.subr.bf16.mxu0 0
        %1633 = vmatpush1.bf16.msra.mxu0 0
        %1634 = vmatprep.subr.bf16.mxu0 0
        %1635 = vmatpush1.bf16.msra.mxu0 0
        %1636 = vmatprep.subr.bf16.mxu0 0
        %1637 = vmatpush1.bf16.msra.mxu0 0
        %1638 = vmatprep.subr.bf16.mxu0 0
        %1639 = vmatpush1.bf16.msra.mxu0 0
        %1640 = vmatprep.subr.bf16.mxu0 0
        %1641 = vmatpush1.bf16.msra.mxu0 0
        %1642 = vmatprep.subr.bf16.mxu0 0
        %1643 = vmatpush1.bf16.msra.mxu0 0
        %1644 = vmatprep.subr.bf16.mxu0 0
        %1645 = vmatpush1.bf16.msra.mxu0 0
        %1646 = vmatprep.subr.bf16.mxu0 0
        %1647 = vmatpush1.bf16.msra.mxu0 0
        %1648 = vmatprep.subr.bf16.mxu0 0
        %1649 = vmatpush1.bf16.msra.mxu0 0
        %1650 = vmatprep.subr.bf16.mxu0 0
        %1651 = vmatpush1.bf16.msra.mxu0 0
        %1652 = vmatprep.mubr.bf16.mxu0 0
        %1653 = vmatmul.mubr.bf16.gmra.mrb[0].mxu0 %v1615
        %v1654 = vpop.f32.mrb[0].mxu0
        %v1655 = vadd.f32 0.0, %v1654
        %v1656 = vpop.f32.mrb[0].mxu0
        %v1657 = vpop.f32.mrb[0].mxu0
        %v1658 = vpop.f32.mrb[0].mxu0
        %1659 = vdwg.mxu0
        %v1660 = vadd.f32 %v1467, %v1517
        %v1661 = vadd.f32 %v1468, %v1563
        %v1662 = vadd.f32 %v1469, %v1609
        %v1663 = vadd.f32 %v1470, %v1655
        %1664 = vst.msk [vmem:[#allocation5] sm:$0xff] %vm1165, %v1660
        %1665 = vst.msk [vmem:[#allocation5 + $0x8] sm:$0xff] %vm1165, %v1661
        %1666 = vst.msk [vmem:[#allocation5 + $0x10] sm:$0xff] %vm1165, %v1662
        %1667 = vst.msk [vmem:[#allocation5 + $0x18] sm:$0xff] %vm1165, %v1663
        %1668 = vst.msk [vmem:[#allocation3] sm:$0xff] %vm1438, %v1366
        %1669 = vst.msk [vmem:[#allocation3 + $0x8] sm:$0xff] %vm1438, %v1367
        %1670 = vst.msk [vmem:[#allocation3 + $0x10] sm:$0xff] %vm1438, %v1368
        %1671 = vst.msk [vmem:[#allocation3 + $0x18] sm:$0xff] %vm1438, %v1369
        // Predicated region
        $region77: #{tpu_custom_call.1} parent=51 // pred_check
          %p1672 = pneg %p480
        $region78: #{tpu_custom_call.1} parent=51 // pred_check_branch
          %1674 = sbr.rel (%p1672) target = $region80
        $region79: #{tpu_custom_call.1} parent=51 // pred_region
          %v1675 = vld [vmem:[#allocation5] sm:$0xff]
          %v1676 = vld [vmem:[#allocation5 + $0x8] sm:$0xff]
          %v1677 = vld [vmem:[#allocation5 + $0x10] sm:$0xff]
          %v1678 = vld [vmem:[#allocation5 + $0x18] sm:$0xff]
          %v1679 = vld [vmem:[#allocation4] sm:$0xff]
          %v1680 = vld [vmem:[#allocation4 + $0x8] sm:$0xff]
          %v1681 = vld [vmem:[#allocation4 + $0x10] sm:$0xff]
          %v1682 = vld [vmem:[#allocation4 + $0x18] sm:$0xff]
          %v1683 = vrcp.pop %v1679
          %v1684 = vrcp.pop %v1680
          %v1685 = vrcp.pop %v1681
          %v1686 = vrcp.pop %v1682
          %1688 = vset.pattern.permute.xlu0 0
          %1689 = vperm.xlu0 %1688, %v1683
          %v1690 = vpop.permute.xlu0 %1689
          %1693 = vset.pattern.permute.xlu0 0
          %1694 = vperm.xlu0 %1693, %v1684
          %v1695 = vpop.permute.xlu0 %1694
          %1698 = vset.pattern.permute.xlu0 0
          %1699 = vperm.xlu0 %1698, %v1685
          %v1700 = vpop.permute.xlu0 %1699
          %1703 = vset.pattern.permute.xlu0 0
          %1704 = vperm.xlu0 %1703, %v1686
          %v1705 = vpop.permute.xlu0 %1704
          %v1707 = vmul.f32 %v1675, %v1690
          %v1708 = vmul.f32 %v1676, %v1695
          %v1709 = vmul.f32 %v1677, %v1700
          %v1710 = vmul.f32 %v1678, %v1705
          %v1711 = vcombine.low %v1707, %v1709
          %v1712 = vcombine.high %v1707, %v1709
          %v1714 = vunpack.c.l.s4 1983009808
          %v1715 = vunpack.c.0.s8 %v1714
          %v1716 = vlaneseq
          %v1717 = vshrl.u32 %v1716, 7
          %v1718 = vsub.s32 %v1715, %v1717
          %v1719 = vrot.slane %v1711, %v1718
          %v1721 = vunpack.c.l.s4 1983009808
          %v1722 = vunpack.c.0.s8 %v1721
          %v1723 = vlaneseq
          %v1724 = vshrl.u32 %v1723, 7
          %v1725 = vsub.s32 %v1722, %v1724
          %v1726 = vrot.slane %v1712, %v1725
          %v1727 = vcombine.low %v1708, %v1710
          %v1728 = vcombine.high %v1708, %v1710
          %v1730 = vunpack.c.l.s4 1983009808
          %v1731 = vunpack.c.0.s8 %v1730
          %v1732 = vlaneseq
          %v1733 = vshrl.u32 %v1732, 7
          %v1734 = vsub.s32 %v1731, %v1733
          %v1735 = vrot.slane %v1727, %v1734
          %v1737 = vunpack.c.l.s4 1983009808
          %v1738 = vunpack.c.0.s8 %v1737
          %v1739 = vlaneseq
          %v1740 = vshrl.u32 %v1739, 7
          %v1741 = vsub.s32 %v1738, %v1740
          %v1742 = vrot.slane %v1728, %v1741
          %v1743 = vcombine.low %v1719, %v1735
          %v1744 = vcombine.high %v1719, %v1735
          %v1746 = vunpack.c.l.s4 1934713408
          %v1747 = vunpack.c.0.s8 %v1746
          %v1748 = vlaneseq
          %v1749 = vshrl.u32 %v1748, 7
          %v1750 = vsub.s32 %v1747, %v1749
          %v1751 = vrot.slane %v1743, %v1750
          %v1753 = vunpack.c.l.s4 1934713408
          %v1754 = vunpack.c.0.s8 %v1753
          %v1755 = vlaneseq
          %v1756 = vshrl.u32 %v1755, 7
          %v1757 = vsub.s32 %v1754, %v1756
          %v1758 = vrot.slane %v1744, %v1757
          %v1759 = vcombine.low %v1726, %v1742
          %v1760 = vcombine.high %v1726, %v1742
          %v1762 = vunpack.c.l.s4 1934713408
          %v1763 = vunpack.c.0.s8 %v1762
          %v1764 = vlaneseq
          %v1765 = vshrl.u32 %v1764, 7
          %v1766 = vsub.s32 %v1763, %v1765
          %v1767 = vrot.slane %v1759, %v1766
          %v1769 = vunpack.c.l.s4 1934713408
          %v1770 = vunpack.c.0.s8 %v1769
          %v1771 = vlaneseq
          %v1772 = vshrl.u32 %v1771, 7
          %v1773 = vsub.s32 %v1770, %v1772
          %v1774 = vrot.slane %v1760, %v1773
          %v1775 = vcombine.high %v1751, 0.0
          %v1776 = vcombine.high %v1758, 0.0
          %v1777 = vcombine.high %v1767, 0.0
          %v1778 = vcombine.high %v1774, 0.0
          %v1779 = vcombine.low %v1751, %v1758
          %v1781 = vunpack.c.l.s4 1983009808
          %v1782 = vunpack.c.0.s8 %v1781
          %v1783 = vlaneseq
          %v1784 = vshrl.u32 %v1783, 7
          %v1785 = vsub.s32 %v1782, %v1784
          %v1786 = vrot.slane %v1779, %v1785
          %v1787 = vcombine.low %v1775, %v1776
          %v1789 = vunpack.c.l.s4 1983009808
          %v1790 = vunpack.c.0.s8 %v1789
          %v1791 = vlaneseq
          %v1792 = vshrl.u32 %v1791, 7
          %v1793 = vsub.s32 %v1790, %v1792
          %v1794 = vrot.slane %v1787, %v1793
          %v1795 = vcombine.low %v1767, %v1774
          %v1797 = vunpack.c.l.s4 1983009808
          %v1798 = vunpack.c.0.s8 %v1797
          %v1799 = vlaneseq
          %v1800 = vshrl.u32 %v1799, 7
          %v1801 = vsub.s32 %v1798, %v1800
          %v1802 = vrot.slane %v1795, %v1801
          %v1803 = vcombine.low %v1777, %v1778
          %v1805 = vunpack.c.l.s4 1983009808
          %v1806 = vunpack.c.0.s8 %v1805
          %v1807 = vlaneseq
          %v1808 = vshrl.u32 %v1807, 7
          %v1809 = vsub.s32 %v1806, %v1808
          %v1810 = vrot.slane %v1803, %v1809
          %v1811 = vcombine.low %v1786, %v1794
          %v1812 = vcombine.high %v1786, %v1794
          %v1814 = vunpack.c.l.s4 1934713408
          %v1815 = vunpack.c.0.s8 %v1814
          %v1816 = vlaneseq
          %v1817 = vshrl.u32 %v1816, 7
          %v1818 = vsub.s32 %v1815, %v1817
          %v1819 = vrot.slane %v1811, %v1818
          %v1821 = vunpack.c.l.s4 1934713408
          %v1822 = vunpack.c.0.s8 %v1821
          %v1823 = vlaneseq
          %v1824 = vshrl.u32 %v1823, 7
          %v1825 = vsub.s32 %v1822, %v1824
          %v1826 = vrot.slane %v1812, %v1825
          %v1827 = vcombine.low %v1802, %v1810
          %v1828 = vcombine.high %v1802, %v1810
          %v1830 = vunpack.c.l.s4 1934713408
          %v1831 = vunpack.c.0.s8 %v1830
          %v1832 = vlaneseq
          %v1833 = vshrl.u32 %v1832, 7
          %v1834 = vsub.s32 %v1831, %v1833
          %v1835 = vrot.slane %v1827, %v1834
          %v1837 = vunpack.c.l.s4 1934713408
          %v1838 = vunpack.c.0.s8 %v1837
          %v1839 = vlaneseq
          %v1840 = vshrl.u32 %v1839, 7
          %v1841 = vsub.s32 %v1838, %v1840
          %v1842 = vrot.slane %v1828, %v1841
          %v1843 = vcombine.low %v1819, %v1835
          %v1844 = vcombine.high %v1819, %v1835
          %v1845 = vcombine.low %v1826, %v1842
          %v1846 = vcombine.high %v1826, %v1842
          %1848 = vrot.lane.b32.xlu0 %v1844, 8
          %v1849 = vpop.permute.xlu0 %1848
          %1852 = vrot.lane.b32.xlu0 %v1845, 16
          %v1853 = vpop.permute.xlu0 %1852
          %1856 = vrot.lane.b32.xlu0 %v1846, 24
          %v1857 = vpop.permute.xlu0 %1856
          %v1859 = vsel %vm1165, %v1843, %v1849
          %vm1860 = vcmask 130048
          %v1861 = vsel %vm1860, %v1859, %v1853
          %vm1862 = vcmask 195584
          %v1863 = vsel %vm1862, %v1861, %v1857
          %v1864 = vpack.c.bf16 %v1863, %v1863
          %v1865 = vld [vmem:[%s5] sm:$0xf]
          %v1866 = vld [vmem:[%s5 + $0x4] sm:$0xf]
          %v1867 = vld [vmem:[%s5 + $0x8] sm:$0xf]
          %v1868 = vld [vmem:[%s5 + $0xc] sm:$0xf]
          %v1869 = vld [vmem:[%s6] sm:$0x1]
          %v1871 = vlaneseq
          %v1872 = vshrl.u32 %v1871, 7
          %v1873 = vsub.s32 0, %v1872
          %v1874 = vrot.slane %v1869, %v1873
          %v1880 = vunpack.c.l.b16 %v1865
          %v1881 = vunpack.c.l.b16 %v1866
          %v1882 = vunpack.c.l.b16 %v1867
          %v1883 = vunpack.c.l.b16 %v1868
          %v1884 = vpack.c.b16 %v1881, %v1880
          %v1885 = vpack.c.b16 %v1883, %v1882
          %v1889 = vsel %vm747, %v1864, 0
          %1891 = vmatprep.subr.bf16.mxu0 0
          %1892 = vmatpush1.bf16.msra.mxu0 %v1884
          %1893 = vmatprep.subr.bf16.mxu0 0
          %1894 = vmatpush1.bf16.msra.mxu0 %v1885
          %1895 = vmatprep.subr.bf16.mxu0 0
          %1896 = vmatpush1.bf16.msra.mxu0 0
          %1897 = vmatprep.subr.bf16.mxu0 0
          %1898 = vmatpush1.bf16.msra.mxu0 0
          %1899 = vmatprep.subr.bf16.mxu0 0
          %1900 = vmatpush1.bf16.msra.mxu0 0
          %1901 = vmatprep.subr.bf16.mxu0 0
          %1902 = vmatpush1.bf16.msra.mxu0 0
          %1903 = vmatprep.subr.bf16.mxu0 0
          %1904 = vmatpush1.bf16.msra.mxu0 0
          %1905 = vmatprep.subr.bf16.mxu0 0
          %1906 = vmatpush1.bf16.msra.mxu0 0
          %1907 = vmatprep.subr.bf16.mxu0 0
          %1908 = vmatpush1.bf16.msra.mxu0 0
          %1909 = vmatprep.subr.bf16.mxu0 0
          %1910 = vmatpush1.bf16.msra.mxu0 0
          %1911 = vmatprep.subr.bf16.mxu0 0
          %1912 = vmatpush1.bf16.msra.mxu0 0
          %1913 = vmatprep.subr.bf16.mxu0 0
          %1914 = vmatpush1.bf16.msra.mxu0 0
          %1915 = vmatprep.subr.bf16.mxu0 0
          %1916 = vmatpush1.bf16.msra.mxu0 0
          %1917 = vmatprep.subr.bf16.mxu0 0
          %1918 = vmatpush1.bf16.msra.mxu0 0
          %1919 = vmatprep.subr.bf16.mxu0 0
          %1920 = vmatpush1.bf16.msra.mxu0 0
          %1921 = vmatprep.subr.bf16.mxu0 0
          %1922 = vmatpush1.bf16.msra.mxu0 0
          %1923 = vmatprep.mubr.bf16.mxu0 0
          %1924 = vmatmul.mubr.bf16.gmra.mrb[0].mxu0 %v1889
          %v1925 = vpop.f32.mrb[0].mxu0
          %v1926 = vadd.f32 %v1874, %v1925
          %v1927 = vpop.f32.mrb[0].mxu0
          %v1928 = vpop.f32.mrb[0].mxu0
          %v1929 = vpop.f32.mrb[0].mxu0
          %1930 = vdwg.mxu0
          %1931 = vst.msk [vmem:[%s471] sm:$0xff] %vm747, %v1926
        $region80: #{tpu_custom_call.1} parent=51 // pred_fallthru
          _
        %s1932 = sand.u32 %s254, 1
        %s1933 = scalar_lea.sflag [#allocation8], %s1932
        %s1934 = sand.u32 %s254, 1
        %s1935 = smul.addr %s1934, 8
        %s1936 = scalar_lea.vmem [#allocation15], %s1935
        // Predicated region
        $region81: #{tpu_custom_call.1} parent=51 // pred_check
          %p1937 = pneg %p264
        $region82: #{tpu_custom_call.1} parent=51 // pred_check_branch
          %1939 = sbr.rel (%p1937) target = $region84
        $region83: #{tpu_custom_call.1} parent=51 // pred_region
          %s1941 = ssub.s32 128, 128
          %1942 = vsyncadd %s1933, %s1941
          %s1943 = sadd.s32 %s35, %s34
          %s1944 = smul.addr %s1943, 128
          %s1945 = scalar_lea.hbm %s8, %s1944
          %s1947 = sshll.u32 %s1936, 4
          %s1948 = int_to_ptr.vmem [resolvable:$true] %s1947
          %1950 = dma.vmem_to_hbm [thread:$0]  %s1948, 128, %s1945, %s1933
        $region84: #{tpu_custom_call.1} parent=51 // pred_fallthru
          _
      $region52: #{tpu_custom_call.1} parent=5 // pred_fallthru
        _
      %p1951 = scmp.le.s32.totalorder 2, %s24
      // Predicated region
      $region85: #{tpu_custom_call.1} parent=5 // pred_check
        %p1952 = pneg %p1951
      $region86: #{tpu_custom_call.1} parent=5 // pred_check_branch
        %1954 = sbr.rel (%p1952) target = $region88
      $region87: #{tpu_custom_call.1} parent=5 // pred_region
        %s1955 = ssub.s32 %s24, 2
        // Predicated region
        $region89: #{tpu_custom_call.1} parent=87 // pred_check
          %p1956 = pneg %p270
        $region90: #{tpu_custom_call.1} parent=87 // pred_check_branch
          %1958 = sbr.rel (%p1956) target = $region92
        $region91: #{tpu_custom_call.1} parent=87 // pred_region
          %s1959 = sand.u32 %s255, 1
          %s1960 = scalar_lea.sflag [#allocation8], %s1959
          %s1961 = sand.u32 %s255, 1
          %s1962 = smul.addr %s1961, 8
          %s1963 = scalar_lea.vmem [#allocation15], %s1962
          %1964 = dma.done %s1960, 128
        $region92: #{tpu_custom_call.1} parent=87 // pred_fallthru
          _
      $region88: #{tpu_custom_call.1} parent=5 // pred_fallthru
        _
    $region6: #{tpu_custom_call.1} parent=1 // loop_footer
      %s28 = sadd.s32 1, %s24
    $region7: #{tpu_custom_call.1} parent=1 // loop_footer_branch
      %23 = sbr.rel target = $region3
    $region8: #{tpu_custom_call.1} parent=1 // loop_exit
      _
    %1965 = vsyncpa [#allocation7], 1
    %s1966 = scalar_lea.sflag [#allocation7], 1
    %1967 = vsyncpa %s1966, 1
    %1968 = vsyncpa [#allocation10], 1
    %s1969 = scalar_lea.sflag [#allocation10], 1
    %1970 = vsyncpa %s1969, 1
    %1971 = vsyncpa [#allocation13], 1
    %1972 = vsyncpa [#allocation8], 1
    %s1973 = scalar_lea.sflag [#allocation8], 1
    %1974 = vsyncpa %s1973, 1

</llo_original>
